<compile_context>
chip_gen: v7x
topology: tpu7x:2x2x1
jax: 0.10.0
libtpu: 0.0.40
codegen_flags: <defaults>
</compile_context>

<pallas_src>
import functools

import jax
import jax.numpy as jnp
from jax.experimental import pallas as pl
from jax.experimental.pallas import tpu as pltpu

BN_EPS = 1e-5        # nn.BatchNorm1d default eps
STD_EPS = 1e-31      # masked_std epsilon from the reference implementation


# ---------------------------------------------------------------------------
# kernels
# ---------------------------------------------------------------------------
def _affine(z, a_ref, relu):
    """Apply a folded BatchNorm (z * scale + shift), optionally + ReLU."""
    z = z * a_ref[0:1, :] + a_ref[1:2, :]
    return jnp.maximum(z, 0.0) if relu else z


def _write_partial_stats(st_ref, z):
    """st_ref[(2, H)] <- [sum over rows, sum of squares over rows] of z."""
    st_ref[0:1, :] = jnp.sum(z, axis=0, keepdims=True)
    st_ref[1:2, :] = jnp.sum(z * z, axis=0, keepdims=True)


def stats1_kernel(x_ref, w1_ref, st_ref):
    # z1 = x @ W1 (bias dropped: it cancels under training-mode batch-stat BN).
    z1 = jnp.dot(x_ref[...], w1_ref[...], preferred_element_type=jnp.float32)
    _write_partial_stats(st_ref, z1)


def stats2_kernel(x_ref, w1_ref, a1_ref, w2_ref, st_ref):
    z1 = jnp.dot(x_ref[...], w1_ref[...], preferred_element_type=jnp.float32)
    h1 = _affine(z1, a1_ref, relu=True)
    z2 = jnp.dot(h1, w2_ref[...], preferred_element_type=jnp.float32)
    _write_partial_stats(st_ref, z2)


def pool_kernel(S, x_ref, m_ref, e_ref, w1_ref, a1_ref, w2_ref, a2_ref, w3_ref,
                z3_ref, st_ref):
    # ---- MLP1 (per-pixel shared MLP), BN folded into (scale, shift) ----
    z1 = jnp.dot(x_ref[...], w1_ref[...], preferred_element_type=jnp.float32)
    h1 = _affine(z1, a1_ref, relu=True)
    z2 = jnp.dot(h1, w2_ref[...], preferred_element_type=jnp.float32)
    h2 = _affine(z2, a2_ref, relu=True)                     # (tn*S, H2)

    # ---- masked mean/std pooling over the pixel axis (single-pass sumsq) ----
    h2dim = h2.shape[-1]
    tn = h2.shape[0] // S
    h3 = h2.reshape(tn, S, h2dim)                           # (tn, S, H2)
    msk = m_ref[...]                                        # (tn, S) in {0, 1}
    mw = msk[:, :, None]                                    # hoisted broadcast
    hm = h3 * mw                                            # masked activations

    cnt = jnp.sum(msk, axis=1, keepdims=True)               # (tn, 1)
    cnt_safe = jnp.maximum(cnt, 1.0)                        # guard empty sets
    mean = jnp.sum(hm, axis=1) / cnt_safe                   # (tn, H2)
    sumsq = jnp.sum(hm * h3, axis=1)                        # mask binary: m*h*h
    var_num = jnp.maximum(sumsq - cnt * mean * mean, 0.0)   # = sum m*(h-mean)^2
    denom = jnp.where(cnt <= 1.0, 1.0, cnt - 1.0)           # torch: d[d==1] = 2
    std = jnp.sqrt(var_num / denom + STD_EPS)               # (tn, H2)

    # ---- MLP2 linear on cat([mean, std, extra]); the concat is folded away
    #      by slicing the stacked W3 row blocks (static slices are free) ----
    w3 = w3_ref[...]
    e = e_ref[...]
    edim = e.shape[-1]
    z3 = (jnp.dot(mean, w3[0:h2dim, :], preferred_element_type=jnp.float32)
          + jnp.dot(std, w3[h2dim:2 * h2dim, :],
                    preferred_element_type=jnp.float32)
          + jnp.dot(e, w3[2 * h2dim:2 * h2dim + edim, :],
                    preferred_element_type=jnp.float32))
    z3_ref[...] = z3
    _write_partial_stats(st_ref, z3)


def bn3_kernel(z_ref, a3_ref, o_ref):
    o_ref[...] = _affine(z_ref[...], a3_ref, relu=False)


# ---------------------------------------------------------------------------
# wrapper
# ---------------------------------------------------------------------------
def _full_spec(a):
    nd = a.ndim
    return pl.BlockSpec(a.shape, lambda i, _nd=nd: (0,) * _nd)


def _pick_tile(N, S, max_rows):
    """Largest divisor tn of N with tn*S <= max_rows, keeping tn (8,128)-friendly."""
    cands = [d for d in range(1, N + 1)
             if N % d == 0 and d * S <= max_rows and (d % 8 == 0 or d == N)]
    return max(cands) if cands else N


def _bn_affine(partials, count, gamma, beta):
    """Fold aggregated batch stats + BN affine params into (scale, shift)."""
    s = jnp.sum(partials, axis=0)                       # (2, H)
    mu = s[0] / count
    var = jnp.maximum(s[1] / count - mu * mu, 0.0)      # single-pass biased var
    scale = gamma.reshape(-1) * jax.lax.rsqrt(var + BN_EPS)
    shift = beta.reshape(-1) - mu * scale
    return jnp.stack([scale, shift], axis=0).astype(jnp.float32)   # (2, H)


def pixel_set_encoder(x, mask, extra, params, *, max_rows=4096):
    """x: (B,T,C,S), mask: (B,T,S), extra: (B,T,E) -> (B,T,D_out)."""
    (w1, b1, g1, be1, w2, b2, g2, be2, w3, b3, g3, be3) = params
    del b1, b2, b3   # mathematically dead under training-mode BN (see header)

    B, T, C, S = x.shape
    N = B * T
    H1, H2 = w1.shape[1], w2.shape[1]
    D_out = w3.shape[1]
    E = w3.shape[0] - 2 * H2

    tn = _pick_tile(N, S, max_rows)      # pixel-sets per grid step
    G = N // tn                          # grid size (tiled over B*T)

    # One relayout of the smallest tensor (fused by XLA with the bf16 cast);
    # consumed by all three x-reading passes below.
    x2 = jnp.transpose(x.reshape(N, C, S), (0, 2, 1)).reshape(N * S, C)
    x2 = x2.astype(jnp.bfloat16)
    mask2 = mask.reshape(N, S).astype(jnp.float32)
    extra2 = extra.reshape(N, E).astype(jnp.float32)

    w1b = w1.astype(jnp.bfloat16)        # bf16 weights on the bf16 MXU path
    w2f = w2.astype(jnp.float32)
    w3f = w3.astype(jnp.float32)

    cparams = pltpu.CompilerParams(
        dimension_semantics=("parallel",),           # megacore sharding on v7x
        vmem_limit_bytes=32 * 1024 * 1024)

    x_spec = pl.BlockSpec((tn * S, C), lambda i: (i, 0))

    def row_spec(d):
        return pl.BlockSpec((tn, d), lambda i: (i, 0))

    def stat_spec(h):
        return pl.BlockSpec((None, 2, h), lambda i: (i, 0, 0))

    count_px = float(N * S)

    # ---- pass 1: batch statistics of z1 ----
    st1 = pl.pallas_call(
        stats1_kernel,
        grid=(G,),
        in_specs=[x_spec, _full_spec(w1b)],
        out_specs=stat_spec(H1),
        out_shape=jax.ShapeDtypeStruct((G, 2, H1), jnp.float32),
        compiler_params=cparams,
    )(x2, w1b)
    a1 = _bn_affine(st1, count_px, g1, be1)

    # ---- pass 2: batch statistics of z2 ----
    st2 = pl.pallas_call(
        stats2_kernel,
        grid=(G,),
        in_specs=[x_spec, _full_spec(w1b), _full_spec(a1), _full_spec(w2f)],
        out_specs=stat_spec(H2),
        out_shape=jax.ShapeDtypeStruct((G, 2, H2), jnp.float32),
        compiler_params=cparams,
    )(x2, w1b, a1, w2f)
    a2 = _bn_affine(st2, count_px, g2, be2)

    # ---- pass 3: MLP1 + masked pooling + MLP2 linear, plus z3 statistics ----
    z3, st3 = pl.pallas_call(
        functools.partial(pool_kernel, S),
        grid=(G,),
        in_specs=[x_spec, row_spec(S), row_spec(E),
                  _full_spec(w1b), _full_spec(a1), _full_spec(w2f),
                  _full_spec(a2), _full_spec(w3f)],
        out_specs=[row_spec(D_out), stat_spec(D_out)],
        out_shape=[jax.ShapeDtypeStruct((N, D_out), jnp.float32),
                   jax.ShapeDtypeStruct((G, 2, D_out), jnp.float32)],
        compiler_params=cparams,
    )(x2, mask2, extra2, w1b, a1, w2f, a2, w3f)
    a3 = _bn_affine(st3, float(N), g3, be3)

    # ---- pass 4: final BatchNorm; z3 is aliased onto the output so the BN is
    #      applied in-place in HBM (lane-dense (tn, 128) stores) ----
    out = pl.pallas_call(
        bn3_kernel,
        grid=(G,),
        in_specs=[row_spec(D_out), _full_spec(a3)],
        out_specs=row_spec(D_out),
        out_shape=jax.ShapeDtypeStruct((N, D_out), jnp.float32),
        input_output_aliases={0: 0},
        compiler_params=cparams,
    )(z3, a3)

    return out.reshape(B, T, D_out)


# ---------------------------------------------------------------------------
# parameters + pure-JAX reference (mirrors the PyTorch module, biases included)
# ---------------------------------------------------------------------------
def make_params(key, mlp1, mlp2):
    """Deterministic synthetic parameters matching the nn.Module shapes."""
    C0, H1, H2 = mlp1
    D_in, D_out = mlp2

    def lin(k, fan_in, fan_out):
        kw, kb = jax.random.split(k)
        bound = 1.0 / (fan_in ** 0.5)
        w = jax.random.uniform(kw, (fan_in, fan_out), jnp.float32, -bound, bound)
        b = jax.random.uniform(kb, (1, fan_out), jnp.float32, -bound, bound)
        return w, b

    def bnp(k, h):
        kg, kb = jax.random.split(k)
        g = jax.random.uniform(kg, (1, h), jnp.float32, 0.5, 1.5)
        be = jax.random.uniform(kb, (1, h), jnp.float32, -0.5, 0.5)
        return g, be

    k1, k2, k3, k4, k5, k6 = jax.random.split(key, 6)
    w1, b1 = lin(k1, C0, H1)
    w2, b2 = lin(k2, H1, H2)
    w3, b3 = lin(k3, D_in, D_out)
    g1, be1 = bnp(k4, H1)
    g2, be2 = bnp(k5, H2)
    g3, be3 = bnp(k6, D_out)
    return (w1, b1, g1, be1, w2, b2, g2, be2, w3, b3, g3, be3)


def reference(x, mask, extra, params):
    """Pure-JAX mirror of the PyTorch forward (training-mode BatchNorm)."""
    (w1, b1, g1, be1, w2, b2, g2, be2, w3, b3, g3, be3) = params
    B, T, C, S = x.shape
    N = B * T
    h = x.reshape(N, C, S).astype(jnp.float32)
    mask2 = mask.reshape(N, S).astype(jnp.float32)
    extra2 = extra.reshape(N, -1).astype(jnp.float32)

    def linlayer(h, w, b, g, be):
        z = jnp.einsum('ncs,cd->nds', h, w) + b.reshape(1, -1, 1)
        mu = z.mean(axis=(0, 2), keepdims=True)
        var = ((z - mu) ** 2).mean(axis=(0, 2), keepdims=True)
        z = (z - mu) / jnp.sqrt(var + BN_EPS) * g.reshape(1, -1, 1) \
            + be.reshape(1, -1, 1)
        return jnp.maximum(z, 0.0)

    h = linlayer(h, w1, b1, g1, be1)
    h = linlayer(h, w2, b2, g2, be2)                 # (N, H2, S)

    cnt = mask2.sum(-1)
    mean = (h * mask2[:, None, :]).sum(-1) / cnt[:, None]
    xm = (h - mean[:, :, None]) * mask2[:, None, :]
    d = jnp.where(cnt == 1.0, 2.0, cnt)
    std = jnp.sqrt((xm ** 2).sum(-1) / (d - 1.0)[:, None] + STD_EPS)

    feat = jnp.concatenate([mean, std, extra2], axis=1)
    z = feat @ w3 + b3
    mu = z.mean(axis=0, keepdims=True)
    var = ((z - mu) ** 2).mean(axis=0, keepdims=True)
    z = (z - mu) / jnp.sqrt(var + BN_EPS) * g3 + be3
    return z.reshape(B, T, -1)


if __name__ == "__main__":
    # Small, consistent config: input_dim=10, mlp1=[10,32,64], pooling='mean_std',
    # extra_size=4  ->  inter_dim = 2*64 + 4 = 132, mlp2=[132,128].
    B, T, S = 2, 4, 16
    input_dim, extra_size = 10, 4
    mlp1 = (input_dim, 32, 64)
    mlp2 = (2 * mlp1[-1] + extra_size, 128)

    key = jax.random.PRNGKey(0)
    kx, km, ke, kp = jax.random.split(key, 4)
    x = jax.random.normal(kx, (B, T, input_dim, S), jnp.float32)
    mask = (jax.random.uniform(km, (B, T, S)) < 0.7).astype(jnp.float32)
    mask = mask.at[..., 0].set(1.0)  # guarantee >=1 valid pixel per set
    extra = jax.random.normal(ke, (B, T, extra_size), jnp.float32)
    params = make_params(kp, mlp1, mlp2)

    fwd = jax.jit(pixel_set_encoder)
    out = jax.block_until_ready(fwd(x, mask, extra, params))

    ref = reference(x, mask, extra, params)
    assert out.shape == (B, T, mlp2[-1]), out.shape
    err = float(jnp.max(jnp.abs(out - ref)))
    # Tolerance is set by the bf16 cast of x / W1 (f32 mode matches to ~1e-4).
    assert err < 5e-2, f"max abs err vs reference: {err}"
    print("KERNEL_OK")
</pallas_src>

<mosaic_0001>
module attributes {stable_mosaic.version = 11 : i64} {
  func.func @stats1_kernel(%arg0: i32, %arg1: memref<128x10xbf16, #tpu.memory_space<vmem>>, %arg2: memref<10x32xbf16, #tpu.memory_space<vmem>>, %arg3: memref<1x2x32xf32, #tpu.memory_space<vmem>>) attributes {dimension_semantics = [#tpu.dimension_semantics<parallel>], iteration_bounds = array<i64: 1>, scalar_prefetch = 0 : i64, scratch_operands = 0 : i64, tpu.core_type = #tpu.core_type<tc>, window_params = [{transform_indices = @transform_0, window_bounds = array<i64: 128, 10>}, {pipeline_mode = #tpu.pipeline_mode<synchronous>, transform_indices = @transform_1, window_bounds = array<i64: 10, 32>}, {transform_indices = @transform_2, window_bounds = array<i64: 1, 2, 32>}]} {
    %c0 = arith.constant 0 : index
    %c0_0 = arith.constant 0 : index
    %0 = vector.load %arg1[%c0, %c0_0] : memref<128x10xbf16, #tpu.memory_space<vmem>>, vector<128x10xbf16>
    %c0_1 = arith.constant 0 : index
    %c0_2 = arith.constant 0 : index
    %1 = vector.load %arg2[%c0_1, %c0_2] : memref<10x32xbf16, #tpu.memory_space<vmem>>, vector<10x32xbf16>
    %cst = arith.constant dense<0.000000e+00> : vector<128x32xf32>
    %2 = tpu.matmul %0, %1, %cst {dimension_numbers = #tpu.dot_dimension_numbers<[1], [0], [0], [1], [0, 0, 1, 1], [], []>} : vector<128x10xbf16>, vector<10x32xbf16>, vector<128x32xf32> -> vector<128x32xf32>
    %cst_3 = arith.constant dense<0.000000e+00> : vector<32xf32>
    %3 = vector.multi_reduction <add>, %2, %cst_3 [0] : vector<128x32xf32> to vector<32xf32>
    %4 = vector.shape_cast %3 : vector<32xf32> to vector<1x32xf32>
    %c0_4 = arith.constant 0 : index
    %c0_5 = arith.constant 0 : index
    %c0_6 = arith.constant 0 : index
    %5 = vector.load %arg3[%c0_4, %c0_5, %c0_6] : memref<1x2x32xf32, #tpu.memory_space<vmem>>, vector<1x1x32xf32>
    %6 = vector.shape_cast %5 : vector<1x1x32xf32> to vector<1x32xf32>
    %7 = vector.shape_cast %4 : vector<1x32xf32> to vector<1x1x32xf32>
    tpu.vector_store %arg3[%c0_4, %c0_5, %c0_6], %7 {strides = array<i32>} : memref<1x2x32xf32, #tpu.memory_space<vmem>>, vector<1x1x32xf32>,
    %8 = arith.mulf %2, %2 : vector<128x32xf32>
    %cst_7 = arith.constant dense<0.000000e+00> : vector<32xf32>
    %9 = vector.multi_reduction <add>, %8, %cst_7 [0] : vector<128x32xf32> to vector<32xf32>
    %10 = vector.shape_cast %9 : vector<32xf32> to vector<1x32xf32>
    %c0_8 = arith.constant 0 : index
    %c1 = arith.constant 1 : index
    %c0_9 = arith.constant 0 : index
    %11 = vector.load %arg3[%c0_8, %c1, %c0_9] : memref<1x2x32xf32, #tpu.memory_space<vmem>>, vector<1x1x32xf32>
    %12 = vector.shape_cast %11 : vector<1x1x32xf32> to vector<1x32xf32>
    %13 = vector.shape_cast %10 : vector<1x32xf32> to vector<1x1x32xf32>
    tpu.vector_store %arg3[%c0_8, %c1, %c0_9], %13 {strides = array<i32>} : memref<1x2x32xf32, #tpu.memory_space<vmem>>, vector<1x1x32xf32>,
    return
  }
  func.func @transform_0(%arg0: i32) -> (i32, i32) {
    %c0_i32 = arith.constant 0 : i32
    %c0_i32_0 = arith.constant 0 : i32
    return %arg0, %c0_i32 : i32, i32
  }
  func.func @transform_1(%arg0: i32) -> (i32, i32) {
    %c0_i32 = arith.constant 0 : i32
    %c0_i32_0 = arith.constant 0 : i32
    %c0_i32_1 = arith.constant 0 : i32
    return %c0_i32, %c0_i32_0 : i32, i32
  }
  func.func @transform_2(%arg0: i32) -> (i32, i32, i32) {
    %c0_i32 = arith.constant 0 : i32
    %c0_i32_0 = arith.constant 0 : i32
    %c0_i32_1 = arith.constant 0 : i32
    return %arg0, %c0_i32, %c0_i32_0 : i32, i32, i32
  }
}

module attributes {stable_mosaic.version = 11 : i64} {
  func.func @stats2_kernel(%arg0: i32, %arg1: memref<128x10xbf16, #tpu.memory_space<vmem>>, %arg2: memref<10x32xbf16, #tpu.memory_space<vmem>>, %arg3: memref<2x32xf32, #tpu.memory_space<vmem>>, %arg4: memref<32x64xf32, #tpu.memory_space<vmem>>, %arg5: memref<1x2x64xf32, #tpu.memory_space<vmem>>) attributes {dimension_semantics = [#tpu.dimension_semantics<parallel>], iteration_bounds = array<i64: 1>, scalar_prefetch = 0 : i64, scratch_operands = 0 : i64, tpu.core_type = #tpu.core_type<tc>, window_params = [{transform_indices = @transform_0, window_bounds = array<i64: 128, 10>}, {pipeline_mode = #tpu.pipeline_mode<synchronous>, transform_indices = @transform_1, window_bounds = array<i64: 10, 32>}, {pipeline_mode = #tpu.pipeline_mode<synchronous>, transform_indices = @transform_2, window_bounds = array<i64: 2, 32>}, {pipeline_mode = #tpu.pipeline_mode<synchronous>, transform_indices = @transform_3, window_bounds = array<i64: 32, 64>}, {transform_indices = @transform_4, window_bounds = array<i64: 1, 2, 64>}]} {
    %c0 = arith.constant 0 : index
    %c0_0 = arith.constant 0 : index
    %0 = vector.load %arg1[%c0, %c0_0] : memref<128x10xbf16, #tpu.memory_space<vmem>>, vector<128x10xbf16>
    %c0_1 = arith.constant 0 : index
    %c0_2 = arith.constant 0 : index
    %1 = vector.load %arg2[%c0_1, %c0_2] : memref<10x32xbf16, #tpu.memory_space<vmem>>, vector<10x32xbf16>
    %cst = arith.constant dense<0.000000e+00> : vector<128x32xf32>
    %2 = tpu.matmul %0, %1, %cst {dimension_numbers = #tpu.dot_dimension_numbers<[1], [0], [0], [1], [0, 0, 1, 1], [], []>} : vector<128x10xbf16>, vector<10x32xbf16>, vector<128x32xf32> -> vector<128x32xf32>
    %c0_3 = arith.constant 0 : index
    %c0_4 = arith.constant 0 : index
    %3 = vector.load %arg3[%c0_3, %c0_4] : memref<2x32xf32, #tpu.memory_space<vmem>>, vector<1x32xf32>
    %4 = vector.broadcast %3 : vector<1x32xf32> to vector<128x32xf32>
    %5 = arith.mulf %2, %4 : vector<128x32xf32>
    %c1 = arith.constant 1 : index
    %c0_5 = arith.constant 0 : index
    %6 = vector.load %arg3[%c1, %c0_5] : memref<2x32xf32, #tpu.memory_space<vmem>>, vector<1x32xf32>
    %7 = vector.broadcast %6 : vector<1x32xf32> to vector<128x32xf32>
    %8 = arith.addf %5, %7 : vector<128x32xf32>
    %cst_6 = arith.constant 0.000000e+00 : f32
    %9 = vector.broadcast %cst_6 : f32 to vector<128x32xf32>
    %10 = arith.maximumf %8, %9 : vector<128x32xf32>
    %c0_7 = arith.constant 0 : index
    %c0_8 = arith.constant 0 : index
    %11 = vector.load %arg4[%c0_7, %c0_8] : memref<32x64xf32, #tpu.memory_space<vmem>>, vector<32x64xf32>
    %cst_9 = arith.constant dense<0.000000e+00> : vector<128x64xf32>
    %12 = tpu.matmul %10, %11, %cst_9 {dimension_numbers = #tpu.dot_dimension_numbers<[1], [0], [0], [1], [0, 0, 1, 1], [], []>} : vector<128x32xf32>, vector<32x64xf32>, vector<128x64xf32> -> vector<128x64xf32>
    %cst_10 = arith.constant dense<0.000000e+00> : vector<64xf32>
    %13 = vector.multi_reduction <add>, %12, %cst_10 [0] : vector<128x64xf32> to vector<64xf32>
    %14 = vector.shape_cast %13 : vector<64xf32> to vector<1x64xf32>
    %c0_11 = arith.constant 0 : index
    %c0_12 = arith.constant 0 : index
    %c0_13 = arith.constant 0 : index
    %15 = vector.load %arg5[%c0_11, %c0_12, %c0_13] : memref<1x2x64xf32, #tpu.memory_space<vmem>>, vector<1x1x64xf32>
    %16 = vector.shape_cast %15 : vector<1x1x64xf32> to vector<1x64xf32>
    %17 = vector.shape_cast %14 : vector<1x64xf32> to vector<1x1x64xf32>
    tpu.vector_store %arg5[%c0_11, %c0_12, %c0_13], %17 {strides = array<i32>} : memref<1x2x64xf32, #tpu.memory_space<vmem>>, vector<1x1x64xf32>,
    %18 = arith.mulf %12, %12 : vector<128x64xf32>
    %cst_14 = arith.constant dense<0.000000e+00> : vector<64xf32>
    %19 = vector.multi_reduction <add>, %18, %cst_14 [0] : vector<128x64xf32> to vector<64xf32>
    %20 = vector.shape_cast %19 : vector<64xf32> to vector<1x64xf32>
    %c0_15 = arith.constant 0 : index
    %c1_16 = arith.constant 1 : index
    %c0_17 = arith.constant 0 : index
    %21 = vector.load %arg5[%c0_15, %c1_16, %c0_17] : memref<1x2x64xf32, #tpu.memory_space<vmem>>, vector<1x1x64xf32>
    %22 = vector.shape_cast %21 : vector<1x1x64xf32> to vector<1x64xf32>
    %23 = vector.shape_cast %20 : vector<1x64xf32> to vector<1x1x64xf32>
    tpu.vector_store %arg5[%c0_15, %c1_16, %c0_17], %23 {strides = array<i32>} : memref<1x2x64xf32, #tpu.memory_space<vmem>>, vector<1x1x64xf32>,
    return
  }
  func.func @transform_0(%arg0: i32) -> (i32, i32) {
    %c0_i32 = arith.constant 0 : i32
    %c0_i32_0 = arith.constant 0 : i32
    return %arg0, %c0_i32 : i32, i32
  }
  func.func @transform_1(%arg0: i32) -> (i32, i32) {
    %c0_i32 = arith.constant 0 : i32
    %c0_i32_0 = arith.constant 0 : i32
    %c0_i32_1 = arith.constant 0 : i32
    return %c0_i32, %c0_i32_0 : i32, i32
  }
  func.func @transform_2(%arg0: i32) -> (i32, i32) {
    %c0_i32 = arith.constant 0 : i32
    %c0_i32_0 = arith.constant 0 : i32
    %c0_i32_1 = arith.constant 0 : i32
    return %c0_i32, %c0_i32_0 : i32, i32
  }
  func.func @transform_3(%arg0: i32) -> (i32, i32) {
    %c0_i32 = arith.constant 0 : i32
    %c0_i32_0 = arith.constant 0 : i32
    %c0_i32_1 = arith.constant 0 : i32
    return %c0_i32, %c0_i32_0 : i32, i32
  }
  func.func @transform_4(%arg0: i32) -> (i32, i32, i32) {
    %c0_i32 = arith.constant 0 : i32
    %c0_i32_0 = arith.constant 0 : i32
    %c0_i32_1 = arith.constant 0 : i32
    return %arg0, %c0_i32, %c0_i32_0 : i32, i32, i32
  }
}

module attributes {stable_mosaic.version = 11 : i64} {
  func.func @pool_kernel(%arg0: i32, %arg1: memref<128x10xbf16, #tpu.memory_space<vmem>>, %arg2: memref<8x16xf32, #tpu.memory_space<vmem>>, %arg3: memref<8x4xf32, #tpu.memory_space<vmem>>, %arg4: memref<10x32xbf16, #tpu.memory_space<vmem>>, %arg5: memref<2x32xf32, #tpu.memory_space<vmem>>, %arg6: memref<32x64xf32, #tpu.memory_space<vmem>>, %arg7: memref<2x64xf32, #tpu.memory_space<vmem>>, %arg8: memref<132x128xf32, #tpu.memory_space<vmem>>, %arg9: memref<8x128xf32, #tpu.memory_space<vmem>>, %arg10: memref<1x2x128xf32, #tpu.memory_space<vmem>>) attributes {dimension_semantics = [#tpu.dimension_semantics<parallel>], iteration_bounds = array<i64: 1>, scalar_prefetch = 0 : i64, scratch_operands = 0 : i64, tpu.core_type = #tpu.core_type<tc>, window_params = [{transform_indices = @transform_0, window_bounds = array<i64: 128, 10>}, {transform_indices = @transform_1, window_bounds = array<i64: 8, 16>}, {transform_indices = @transform_2, window_bounds = array<i64: 8, 4>}, {pipeline_mode = #tpu.pipeline_mode<synchronous>, transform_indices = @transform_3, window_bounds = array<i64: 10, 32>}, {pipeline_mode = #tpu.pipeline_mode<synchronous>, transform_indices = @transform_4, window_bounds = array<i64: 2, 32>}, {pipeline_mode = #tpu.pipeline_mode<synchronous>, transform_indices = @transform_5, window_bounds = array<i64: 32, 64>}, {pipeline_mode = #tpu.pipeline_mode<synchronous>, transform_indices = @transform_6, window_bounds = array<i64: 2, 64>}, {pipeline_mode = #tpu.pipeline_mode<synchronous>, transform_indices = @transform_7, window_bounds = array<i64: 132, 128>}, {transform_indices = @transform_8, window_bounds = array<i64: 8, 128>}, {transform_indices = @transform_9, window_bounds = array<i64: 1, 2, 128>}]} {
    %c0 = arith.constant 0 : index
    %c0_0 = arith.constant 0 : index
    %0 = vector.load %arg1[%c0, %c0_0] : memref<128x10xbf16, #tpu.memory_space<vmem>>, vector<128x10xbf16>
    %c0_1 = arith.constant 0 : index
    %c0_2 = arith.constant 0 : index
    %1 = vector.load %arg4[%c0_1, %c0_2] : memref<10x32xbf16, #tpu.memory_space<vmem>>, vector<10x32xbf16>
    %cst = arith.constant dense<0.000000e+00> : vector<128x32xf32>
    %2 = tpu.matmul %0, %1, %cst {dimension_numbers = #tpu.dot_dimension_numbers<[1], [0], [0], [1], [0, 0, 1, 1], [], []>} : vector<128x10xbf16>, vector<10x32xbf16>, vector<128x32xf32> -> vector<128x32xf32>
    %c0_3 = arith.constant 0 : index
    %c0_4 = arith.constant 0 : index
    %3 = vector.load %arg5[%c0_3, %c0_4] : memref<2x32xf32, #tpu.memory_space<vmem>>, vector<1x32xf32>
    %4 = vector.broadcast %3 : vector<1x32xf32> to vector<128x32xf32>
    %5 = arith.mulf %2, %4 : vector<128x32xf32>
    %c1 = arith.constant 1 : index
    %c0_5 = arith.constant 0 : index
    %6 = vector.load %arg5[%c1, %c0_5] : memref<2x32xf32, #tpu.memory_space<vmem>>, vector<1x32xf32>
    %7 = vector.broadcast %6 : vector<1x32xf32> to vector<128x32xf32>
    %8 = arith.addf %5, %7 : vector<128x32xf32>
    %cst_6 = arith.constant 0.000000e+00 : f32
    %9 = vector.broadcast %cst_6 : f32 to vector<128x32xf32>
    %10 = arith.maximumf %8, %9 : vector<128x32xf32>
    %c0_7 = arith.constant 0 : index
    %c0_8 = arith.constant 0 : index
    %11 = vector.load %arg6[%c0_7, %c0_8] : memref<32x64xf32, #tpu.memory_space<vmem>>, vector<32x64xf32>
    %cst_9 = arith.constant dense<0.000000e+00> : vector<128x64xf32>
    %12 = tpu.matmul %10, %11, %cst_9 {dimension_numbers = #tpu.dot_dimension_numbers<[1], [0], [0], [1], [0, 0, 1, 1], [], []>} : vector<128x32xf32>, vector<32x64xf32>, vector<128x64xf32> -> vector<128x64xf32>
    %c0_10 = arith.constant 0 : index
    %c0_11 = arith.constant 0 : index
    %13 = vector.load %arg7[%c0_10, %c0_11] : memref<2x64xf32, #tpu.memory_space<vmem>>, vector<1x64xf32>
    %14 = vector.broadcast %13 : vector<1x64xf32> to vector<128x64xf32>
    %15 = arith.mulf %12, %14 : vector<128x64xf32>
    %c1_12 = arith.constant 1 : index
    %c0_13 = arith.constant 0 : index
    %16 = vector.load %arg7[%c1_12, %c0_13] : memref<2x64xf32, #tpu.memory_space<vmem>>, vector<1x64xf32>
    %17 = vector.broadcast %16 : vector<1x64xf32> to vector<128x64xf32>
    %18 = arith.addf %15, %17 : vector<128x64xf32>
    %cst_14 = arith.constant 0.000000e+00 : f32
    %19 = vector.broadcast %cst_14 : f32 to vector<128x64xf32>
    %20 = arith.maximumf %18, %19 : vector<128x64xf32>
    %21 = vector.shape_cast %20 : vector<128x64xf32> to vector<8x16x64xf32>
    %c0_15 = arith.constant 0 : index
    %c0_16 = arith.constant 0 : index
    %22 = vector.load %arg2[%c0_15, %c0_16] : memref<8x16xf32, #tpu.memory_space<vmem>>, vector<8x16xf32>
    %23 = vector.shape_cast %22 : vector<8x16xf32> to vector<8x16x1xf32>
    %24 = vector.broadcast %23 : vector<8x16x1xf32> to vector<8x16x64xf32>
    %25 = arith.mulf %21, %24 : vector<8x16x64xf32>
    %cst_17 = arith.constant dense<0.000000e+00> : vector<8xf32>
    %26 = vector.multi_reduction <add>, %22, %cst_17 [1] : vector<8x16xf32> to vector<8xf32>
    %27 = vector.shape_cast %26 : vector<8xf32> to vector<8x1xf32>
    %cst_18 = arith.constant 1.000000e+00 : f32
    %28 = vector.broadcast %cst_18 : f32 to vector<8x1xf32>
    %29 = arith.maximumf %27, %28 : vector<8x1xf32>
    %cst_19 = arith.constant dense<0.000000e+00> : vector<8x64xf32>
    %30 = vector.multi_reduction <add>, %25, %cst_19 [1] : vector<8x16x64xf32> to vector<8x64xf32>
    %31 = vector.broadcast %29 : vector<8x1xf32> to vector<8x64xf32>
    %32 = arith.divf %30, %31 : vector<8x64xf32>
    %33 = arith.mulf %25, %21 : vector<8x16x64xf32>
    %cst_20 = arith.constant dense<0.000000e+00> : vector<8x64xf32>
    %34 = vector.multi_reduction <add>, %33, %cst_20 [1] : vector<8x16x64xf32> to vector<8x64xf32>
    %35 = vector.broadcast %27 : vector<8x1xf32> to vector<8x64xf32>
    %36 = arith.mulf %35, %32 : vector<8x64xf32>
    %37 = arith.mulf %36, %32 : vector<8x64xf32>
    %38 = arith.subf %34, %37 : vector<8x64xf32>
    %cst_21 = arith.constant 0.000000e+00 : f32
    %39 = vector.broadcast %cst_21 : f32 to vector<8x64xf32>
    %40 = arith.maximumf %38, %39 : vector<8x64xf32>
    %cst_22 = arith.constant 1.000000e+00 : f32
    %41 = vector.broadcast %cst_22 : f32 to vector<8x1xf32>
    %42 = arith.cmpf ole, %27, %41 : vector<8x1xf32>
    %cst_23 = arith.constant 1.000000e+00 : f32
    %43 = vector.broadcast %cst_23 : f32 to vector<8x1xf32>
    %44 = arith.subf %27, %43 : vector<8x1xf32>
    %cst_24 = arith.constant 1.000000e+00 : f32
    %45 = vector.broadcast %cst_24 : f32 to vector<8x1xf32>
    %46 = arith.select %42, %45, %44 : vector<8x1xi1>, vector<8x1xf32>
    %47 = vector.broadcast %46 : vector<8x1xf32> to vector<8x64xf32>
    %48 = arith.divf %40, %47 : vector<8x64xf32>
    %cst_25 = arith.constant 9.99999979E-32 : f32
    %49 = vector.broadcast %cst_25 : f32 to vector<8x64xf32>
    %50 = arith.addf %48, %49 : vector<8x64xf32>
    %51 = math.sqrt %50 : vector<8x64xf32>
    %c0_26 = arith.constant 0 : index
    %c0_27 = arith.constant 0 : index
    %52 = vector.load %arg8[%c0_26, %c0_27] : memref<132x128xf32, #tpu.memory_space<vmem>>, vector<132x128xf32>
    %c0_28 = arith.constant 0 : index
    %c0_29 = arith.constant 0 : index
    %53 = vector.load %arg3[%c0_28, %c0_29] : memref<8x4xf32, #tpu.memory_space<vmem>>, vector<8x4xf32>
    %54 = vector.extract_strided_slice %52 {offsets = [0, 0], sizes = [64, 128], strides = [1, 1]} : vector<132x128xf32> to vector<64x128xf32>
    %cst_30 = arith.constant dense<0.000000e+00> : vector<8x128xf32>
    %55 = tpu.matmul %32, %54, %cst_30 {dimension_numbers = #tpu.dot_dimension_numbers<[1], [0], [0], [1], [0, 0, 1, 1], [], []>} : vector<8x64xf32>, vector<64x128xf32>, vector<8x128xf32> -> vector<8x128xf32>
    %56 = vector.extract_strided_slice %52 {offsets = [64, 0], sizes = [64, 128], strides = [1, 1]} : vector<132x128xf32> to vector<64x128xf32>
    %cst_31 = arith.constant dense<0.000000e+00> : vector<8x128xf32>
    %57 = tpu.matmul %51, %56, %cst_31 {dimension_numbers = #tpu.dot_dimension_numbers<[1], [0], [0], [1], [0, 0, 1, 1], [], []>} : vector<8x64xf32>, vector<64x128xf32>, vector<8x128xf32> -> vector<8x128xf32>
    %58 = arith.addf %55, %57 : vector<8x128xf32>
    %59 = vector.extract_strided_slice %52 {offsets = [128, 0], sizes = [4, 128], strides = [1, 1]} : vector<132x128xf32> to vector<4x128xf32>
    %cst_32 = arith.constant dense<0.000000e+00> : vector<8x128xf32>
    %60 = tpu.matmul %53, %59, %cst_32 {dimension_numbers = #tpu.dot_dimension_numbers<[1], [0], [0], [1], [0, 0, 1, 1], [], []>} : vector<8x4xf32>, vector<4x128xf32>, vector<8x128xf32> -> vector<8x128xf32>
    %61 = arith.addf %58, %60 : vector<8x128xf32>
    %c0_33 = arith.constant 0 : index
    %c0_34 = arith.constant 0 : index
    %62 = vector.load %arg9[%c0_33, %c0_34] : memref<8x128xf32, #tpu.memory_space<vmem>>, vector<8x128xf32>
    tpu.vector_store %arg9[%c0_33, %c0_34], %61 {strides = array<i32>} : memref<8x128xf32, #tpu.memory_space<vmem>>, vector<8x128xf32>,
    %cst_35 = arith.constant dense<0.000000e+00> : vector<128xf32>
    %63 = vector.multi_reduction <add>, %61, %cst_35 [0] : vector<8x128xf32> to vector<128xf32>
    %64 = vector.shape_cast %63 : vector<128xf32> to vector<1x128xf32>
    %c0_36 = arith.constant 0 : index
    %c0_37 = arith.constant 0 : index
    %c0_38 = arith.constant 0 : index
    %65 = vector.load %arg10[%c0_36, %c0_37, %c0_38] : memref<1x2x128xf32, #tpu.memory_space<vmem>>, vector<1x1x128xf32>
    %66 = vector.shape_cast %65 : vector<1x1x128xf32> to vector<1x128xf32>
    %67 = vector.shape_cast %64 : vector<1x128xf32> to vector<1x1x128xf32>
    tpu.vector_store %arg10[%c0_36, %c0_37, %c0_38], %67 {strides = array<i32>} : memref<1x2x128xf32, #tpu.memory_space<vmem>>, vector<1x1x128xf32>,
    %68 = arith.mulf %61, %61 : vector<8x128xf32>
    %cst_39 = arith.constant dense<0.000000e+00> : vector<128xf32>
    %69 = vector.multi_reduction <add>, %68, %cst_39 [0] : vector<8x128xf32> to vector<128xf32>
    %70 = vector.shape_cast %69 : vector<128xf32> to vector<1x128xf32>
    %c0_40 = arith.constant 0 : index
    %c1_41 = arith.constant 1 : index
    %c0_42 = arith.constant 0 : index
    %71 = vector.load %arg10[%c0_40, %c1_41, %c0_42] : memref<1x2x128xf32, #tpu.memory_space<vmem>>, vector<1x1x128xf32>
    %72 = vector.shape_cast %71 : vector<1x1x128xf32> to vector<1x128xf32>
    %73 = vector.shape_cast %70 : vector<1x128xf32> to vector<1x1x128xf32>
    tpu.vector_store %arg10[%c0_40, %c1_41, %c0_42], %73 {strides = array<i32>} : memref<1x2x128xf32, #tpu.memory_space<vmem>>, vector<1x1x128xf32>,
    return
  }
  func.func @transform_0(%arg0: i32) -> (i32, i32) {
    %c0_i32 = arith.constant 0 : i32
    %c0_i32_0 = arith.constant 0 : i32
    return %arg0, %c0_i32 : i32, i32
  }
  func.func @transform_1(%arg0: i32) -> (i32, i32) {
    %c0_i32 = arith.constant 0 : i32
    %c0_i32_0 = arith.constant 0 : i32
    return %arg0, %c0_i32 : i32, i32
  }
  func.func @transform_2(%arg0: i32) -> (i32, i32) {
    %c0_i32 = arith.constant 0 : i32
    %c0_i32_0 = arith.constant 0 : i32
    return %arg0, %c0_i32 : i32, i32
  }
  func.func @transform_3(%arg0: i32) -> (i32, i32) {
    %c0_i32 = arith.constant 0 : i32
    %c0_i32_0 = arith.constant 0 : i32
    %c0_i32_1 = arith.constant 0 : i32
    return %c0_i32, %c0_i32_0 : i32, i32
  }
  func.func @transform_4(%arg0: i32) -> (i32, i32) {
    %c0_i32 = arith.constant 0 : i32
    %c0_i32_0 = arith.constant 0 : i32
    %c0_i32_1 = arith.constant 0 : i32
    return %c0_i32, %c0_i32_0 : i32, i32
  }
  func.func @transform_5(%arg0: i32) -> (i32, i32) {
    %c0_i32 = arith.constant 0 : i32
    %c0_i32_0 = arith.constant 0 : i32
    %c0_i32_1 = arith.constant 0 : i32
    return %c0_i32, %c0_i32_0 : i32, i32
  }
  func.func @transform_6(%arg0: i32) -> (i32, i32) {
    %c0_i32 = arith.constant 0 : i32
    %c0_i32_0 = arith.constant 0 : i32
    %c0_i32_1 = arith.constant 0 : i32
    return %c0_i32, %c0_i32_0 : i32, i32
  }
  func.func @transform_7(%arg0: i32) -> (i32, i32) {
    %c0_i32 = arith.constant 0 : i32
    %c0_i32_0 = arith.constant 0 : i32
    %c0_i32_1 = arith.constant 0 : i32
    return %c0_i32, %c0_i32_0 : i32, i32
  }
  func.func @transform_8(%arg0: i32) -> (i32, i32) {
    %c0_i32 = arith.constant 0 : i32
    %c0_i32_0 = arith.constant 0 : i32
    return %arg0, %c0_i32 : i32, i32
  }
  func.func @transform_9(%arg0: i32) -> (i32, i32, i32) {
    %c0_i32 = arith.constant 0 : i32
    %c0_i32_0 = arith.constant 0 : i32
    %c0_i32_1 = arith.constant 0 : i32
    return %arg0, %c0_i32, %c0_i32_0 : i32, i32, i32
  }
}

module attributes {stable_mosaic.version = 11 : i64} {
  func.func @bn3_kernel(%arg0: i32, %arg1: memref<8x128xf32, #tpu.memory_space<vmem>>, %arg2: memref<2x128xf32, #tpu.memory_space<vmem>>, %arg3: memref<8x128xf32, #tpu.memory_space<vmem>>) attributes {dimension_semantics = [#tpu.dimension_semantics<parallel>], iteration_bounds = array<i64: 1>, scalar_prefetch = 0 : i64, scratch_operands = 0 : i64, tpu.core_type = #tpu.core_type<tc>, window_params = [{transform_indices = @transform_0, window_bounds = array<i64: 8, 128>}, {pipeline_mode = #tpu.pipeline_mode<synchronous>, transform_indices = @transform_1, window_bounds = array<i64: 2, 128>}, {transform_indices = @transform_2, window_bounds = array<i64: 8, 128>}]} {
    %c0 = arith.constant 0 : index
    %c0_0 = arith.constant 0 : index
    %0 = vector.load %arg1[%c0, %c0_0] : memref<8x128xf32, #tpu.memory_space<vmem>>, vector<8x128xf32>
    %c0_1 = arith.constant 0 : index
    %c0_2 = arith.constant 0 : index
    %1 = vector.load %arg2[%c0_1, %c0_2] : memref<2x128xf32, #tpu.memory_space<vmem>>, vector<1x128xf32>
    %2 = vector.broadcast %1 : vector<1x128xf32> to vector<8x128xf32>
    %3 = arith.mulf %0, %2 : vector<8x128xf32>
    %c1 = arith.constant 1 : index
    %c0_3 = arith.constant 0 : index
    %4 = vector.load %arg2[%c1, %c0_3] : memref<2x128xf32, #tpu.memory_space<vmem>>, vector<1x128xf32>
    %5 = vector.broadcast %4 : vector<1x128xf32> to vector<8x128xf32>
    %6 = arith.addf %3, %5 : vector<8x128xf32>
    %c0_4 = arith.constant 0 : index
    %c0_5 = arith.constant 0 : index
    %7 = vector.load %arg3[%c0_4, %c0_5] : memref<8x128xf32, #tpu.memory_space<vmem>>, vector<8x128xf32>
    tpu.vector_store %arg3[%c0_4, %c0_5], %6 {strides = array<i32>} : memref<8x128xf32, #tpu.memory_space<vmem>>, vector<8x128xf32>,
    return
  }
  func.func @transform_0(%arg0: i32) -> (i32, i32) {
    %c0_i32 = arith.constant 0 : i32
    %c0_i32_0 = arith.constant 0 : i32
    return %arg0, %c0_i32 : i32, i32
  }
  func.func @transform_1(%arg0: i32) -> (i32, i32) {
    %c0_i32 = arith.constant 0 : i32
    %c0_i32_0 = arith.constant 0 : i32
    %c0_i32_1 = arith.constant 0 : i32
    return %c0_i32, %c0_i32_0 : i32, i32
  }
  func.func @transform_2(%arg0: i32) -> (i32, i32) {
    %c0_i32 = arith.constant 0 : i32
    %c0_i32_0 = arith.constant 0 : i32
    return %arg0, %c0_i32 : i32, i32
  }
}

</mosaic_0001>

<llo_original>
// kernel: pixel_set_encoder.4
$region0: #{pixel_set_encoder.4}
  #allocation0 [shape = 'u32[]', space=smem, size = 0x4, offset = 0x4, fixed_abs, tag = 'smem constant byte address 0x4 - core index']
  #allocation1 [shape = 'u32[144,128]{1,0:T(1,128)}', space=vmem, size = 0x12000, scoped, tag = 'internal scratch']
  %s0 = inlined_call_operand.vmem [shape: bf16[128,10], index: 0, kind: input, shape index: {}]
  %s1 = inlined_call_operand.vmem [shape: bf16[10,32], index: 1, kind: input, shape index: {}]
  %s2 = inlined_call_operand.vmem [shape: f32[1,2,32], index: 2, kind: output, shape index: {}]
  %s3 = sld [smem:[#allocation0]]
  $region18: #{pixel_set_encoder.4} parent=0
    _
  %s5 = ssub.s32 1, %s3
  %s6 = scalar_select 0, %s5, %s3
  // Predicated region
  $region2: #{pixel_set_encoder.4} parent=0 // pred_check
    _
  $region3: #{pixel_set_encoder.4} parent=0 // pred_check_branch
    %8 = sbr.rel (0) target = $region5
  $region4: #{pixel_set_encoder.4} parent=0 // pred_region
    _
  $region5: #{pixel_set_encoder.4} parent=0 // pred_fallthru
    _
  // Predicated region
  $region6: #{pixel_set_encoder.4} parent=0 // pred_check
    _
  $region7: #{pixel_set_encoder.4} parent=0 // pred_check_branch
    %10 = sbr.rel (0) target = $region9
  $region8: #{pixel_set_encoder.4} parent=0 // pred_region
    _
  $region9: #{pixel_set_encoder.4} parent=0 // pred_fallthru
    _
  %v12 = vld [vmem:[%s0] sm:$0xf]
  %v13 = vld [vmem:[%s0 + $0x4] sm:$0xf]
  %v14 = vld [vmem:[%s0 + $0x8] sm:$0xf]
  %v15 = vld [vmem:[%s0 + $0xc] sm:$0xf]
  %v16 = vld [vmem:[%s0 + $0x10] sm:$0xf]
  %v17 = vld [vmem:[%s0 + $0x14] sm:$0xf]
  %v18 = vld [vmem:[%s0 + $0x18] sm:$0xf]
  %v19 = vld [vmem:[%s0 + $0x1c] sm:$0xf]
  %v20 = vld [vmem:[%s0 + $0x20] sm:$0xf]
  %v21 = vld [vmem:[%s0 + $0x24] sm:$0xf]
  %v22 = vld [vmem:[%s0 + $0x28] sm:$0xf]
  %v23 = vld [vmem:[%s0 + $0x2c] sm:$0xf]
  %v24 = vld [vmem:[%s0 + $0x30] sm:$0xf]
  %v25 = vld [vmem:[%s0 + $0x34] sm:$0xf]
  %v26 = vld [vmem:[%s0 + $0x38] sm:$0xf]
  %v27 = vld [vmem:[%s0 + $0x3c] sm:$0xf]
  %v28 = vld [vmem:[%s1] sm:$0xf]
  %v29 = vld [vmem:[%s1 + $0x4] sm:$0x1]
  %v46 = vunpack.c.l.b16 %v12
  %v47 = vunpack.c.l.b16 %v13
  %v48 = vunpack.c.l.b16 %v14
  %v49 = vunpack.c.l.b16 %v15
  %v50 = vunpack.c.l.b16 %v16
  %v51 = vunpack.c.l.b16 %v17
  %v52 = vunpack.c.l.b16 %v18
  %v53 = vunpack.c.l.b16 %v19
  %v54 = vunpack.c.l.b16 %v20
  %v55 = vunpack.c.l.b16 %v21
  %v56 = vunpack.c.l.b16 %v22
  %v57 = vunpack.c.l.b16 %v23
  %v58 = vunpack.c.l.b16 %v24
  %v59 = vunpack.c.l.b16 %v25
  %v60 = vunpack.c.l.b16 %v26
  %v61 = vunpack.c.l.b16 %v27
  %v62 = vpack.c.b16 %v47, %v46
  %v63 = vpack.c.b16 %v49, %v48
  %v64 = vpack.c.b16 %v51, %v50
  %v65 = vpack.c.b16 %v53, %v52
  %v66 = vpack.c.b16 %v55, %v54
  %v67 = vpack.c.b16 %v57, %v56
  %v68 = vpack.c.b16 %v59, %v58
  %v69 = vpack.c.b16 %v61, %v60
  %v72 = vunpack.c.l.b16 %v28
  %v73 = vunpack.c.l.b16 %v29
  %v74 = vpack.c.b16 %v73, %v72
  %vm75 = vcmask 80896
  %v77 = vsel %vm75, %v62, 0
  %v80 = vsel %vm75, %v63, 0
  %v83 = vsel %vm75, %v64, 0
  %v86 = vsel %vm75, %v65, 0
  %v89 = vsel %vm75, %v66, 0
  %v92 = vsel %vm75, %v67, 0
  %v95 = vsel %vm75, %v68, 0
  %v98 = vsel %vm75, %v69, 0
  %vm100 = vcmask 1044480
  %v102 = vsel %vm100, %v74, 0
  %104 = vmatprep.subr.bf16.mxu0 0
  %105 = vmatpush1.bf16.msra.mxu0 %v102
  %106 = vmatprep.subr.bf16.mxu0 0
  %107 = vmatpush1.bf16.msra.mxu0 0
  %108 = vmatprep.subr.bf16.mxu0 0
  %109 = vmatpush1.bf16.msra.mxu0 0
  %110 = vmatprep.subr.bf16.mxu0 0
  %111 = vmatpush1.bf16.msra.mxu0 0
  %112 = vmatprep.subr.bf16.mxu0 0
  %113 = vmatpush1.bf16.msra.mxu0 0
  %114 = vmatprep.subr.bf16.mxu0 0
  %115 = vmatpush1.bf16.msra.mxu0 0
  %116 = vmatprep.subr.bf16.mxu0 0
  %117 = vmatpush1.bf16.msra.mxu0 0
  %118 = vmatprep.subr.bf16.mxu0 0
  %119 = vmatpush1.bf16.msra.mxu0 0
  %120 = vmatprep.subr.bf16.mxu0 0
  %121 = vmatpush1.bf16.msra.mxu0 0
  %122 = vmatprep.subr.bf16.mxu0 0
  %123 = vmatpush1.bf16.msra.mxu0 0
  %124 = vmatprep.subr.bf16.mxu0 0
  %125 = vmatpush1.bf16.msra.mxu0 0
  %126 = vmatprep.subr.bf16.mxu0 0
  %127 = vmatpush1.bf16.msra.mxu0 0
  %128 = vmatprep.subr.bf16.mxu0 0
  %129 = vmatpush1.bf16.msra.mxu0 0
  %130 = vmatprep.subr.bf16.mxu0 0
  %131 = vmatpush1.bf16.msra.mxu0 0
  %132 = vmatprep.subr.bf16.mxu0 0
  %133 = vmatpush1.bf16.msra.mxu0 0
  %134 = vmatprep.subr.bf16.mxu0 0
  %135 = vmatpush1.bf16.msra.mxu0 0
  %136 = vmatprep.mubr.bf16.mxu0 0
  %137 = vmatmul.mubr.bf16.gmra.mrb[0].mxu0 %v77
  %v138 = vpop.f32.mrb[0].mxu0
  %v139 = vadd.f32 0.0, %v138
  %v140 = vpop.f32.mrb[0].mxu0
  %v141 = vpop.f32.mrb[0].mxu0
  %v142 = vadd.f32 0.0, %v141
  %v143 = vpop.f32.mrb[0].mxu0
  %144 = vmatprep.mubr.bf16.mxu0 0
  %145 = vmatmul.mubr.bf16.gmra.mrb[0].mxu0 %v80
  %v146 = vpop.f32.mrb[0].mxu0
  %v147 = vadd.f32 0.0, %v146
  %v148 = vpop.f32.mrb[0].mxu0
  %v149 = vpop.f32.mrb[0].mxu0
  %v150 = vadd.f32 0.0, %v149
  %v151 = vpop.f32.mrb[0].mxu0
  %152 = vmatprep.mubr.bf16.mxu0 0
  %153 = vmatmul.mubr.bf16.gmra.mrb[0].mxu0 %v83
  %v154 = vpop.f32.mrb[0].mxu0
  %v155 = vadd.f32 0.0, %v154
  %v156 = vpop.f32.mrb[0].mxu0
  %v157 = vpop.f32.mrb[0].mxu0
  %v158 = vadd.f32 0.0, %v157
  %v159 = vpop.f32.mrb[0].mxu0
  %160 = vmatprep.mubr.bf16.mxu0 0
  %161 = vmatmul.mubr.bf16.gmra.mrb[0].mxu0 %v86
  %v162 = vpop.f32.mrb[0].mxu0
  %v163 = vadd.f32 0.0, %v162
  %v164 = vpop.f32.mrb[0].mxu0
  %v165 = vpop.f32.mrb[0].mxu0
  %v166 = vadd.f32 0.0, %v165
  %v167 = vpop.f32.mrb[0].mxu0
  %168 = vmatprep.mubr.bf16.mxu0 0
  %169 = vmatmul.mubr.bf16.gmra.mrb[0].mxu0 %v89
  %v170 = vpop.f32.mrb[0].mxu0
  %v171 = vadd.f32 0.0, %v170
  %v172 = vpop.f32.mrb[0].mxu0
  %v173 = vpop.f32.mrb[0].mxu0
  %v174 = vadd.f32 0.0, %v173
  %v175 = vpop.f32.mrb[0].mxu0
  %176 = vmatprep.mubr.bf16.mxu0 0
  %177 = vmatmul.mubr.bf16.gmra.mrb[0].mxu0 %v92
  %v178 = vpop.f32.mrb[0].mxu0
  %v179 = vadd.f32 0.0, %v178
  %v180 = vpop.f32.mrb[0].mxu0
  %v181 = vpop.f32.mrb[0].mxu0
  %v182 = vadd.f32 0.0, %v181
  %v183 = vpop.f32.mrb[0].mxu0
  %184 = vmatprep.mubr.bf16.mxu0 0
  %185 = vmatmul.mubr.bf16.gmra.mrb[0].mxu0 %v95
  %v186 = vpop.f32.mrb[0].mxu0
  %v187 = vadd.f32 0.0, %v186
  %v188 = vpop.f32.mrb[0].mxu0
  %v189 = vpop.f32.mrb[0].mxu0
  %v190 = vadd.f32 0.0, %v189
  %v191 = vpop.f32.mrb[0].mxu0
  %192 = vmatprep.mubr.bf16.mxu0 0
  %193 = vmatmul.mubr.bf16.gmra.mrb[0].mxu0 %v98
  %v194 = vpop.f32.mrb[0].mxu0
  %v195 = vadd.f32 0.0, %v194
  %v196 = vpop.f32.mrb[0].mxu0
  %v197 = vpop.f32.mrb[0].mxu0
  %v198 = vadd.f32 0.0, %v197
  %v199 = vpop.f32.mrb[0].mxu0
  %200 = vdwg.mxu0
  %vm201 = vcmask 261120
  %v202 = vsel %vm201, %v139, 0.0
  %v203 = vsel %vm201, %v142, 0.0
  %v204 = vadd.f32 %v202, %v203
  %v205 = vsel %vm201, %v147, 0.0
  %v206 = vadd.f32 %v204, %v205
  %v207 = vsel %vm201, %v150, 0.0
  %v208 = vadd.f32 %v206, %v207
  %v209 = vsel %vm201, %v155, 0.0
  %v210 = vadd.f32 %v208, %v209
  %v211 = vsel %vm201, %v158, 0.0
  %v212 = vadd.f32 %v210, %v211
  %v213 = vsel %vm201, %v163, 0.0
  %v214 = vadd.f32 %v212, %v213
  %v215 = vsel %vm201, %v166, 0.0
  %v216 = vadd.f32 %v214, %v215
  %v217 = vsel %vm201, %v171, 0.0
  %v218 = vadd.f32 %v216, %v217
  %v219 = vsel %vm201, %v174, 0.0
  %v220 = vadd.f32 %v218, %v219
  %v221 = vsel %vm201, %v179, 0.0
  %v222 = vadd.f32 %v220, %v221
  %v223 = vsel %vm201, %v182, 0.0
  %v224 = vadd.f32 %v222, %v223
  %v225 = vsel %vm201, %v187, 0.0
  %v226 = vadd.f32 %v224, %v225
  %v227 = vsel %vm201, %v190, 0.0
  %v228 = vadd.f32 %v226, %v227
  %v229 = vsel %vm201, %v195, 0.0
  %v230 = vadd.f32 %v228, %v229
  %v231 = vsel %vm201, %v198, 0.0
  %v232 = vadd.f32 %v230, %v231
  %v233 = vrot.slane %v232, 4
  %v234 = vadd.f32 %v232, %v233
  %v235 = vrot.slane %v234, 2
  %v236 = vadd.f32 %v234, %v235
  %v237 = vrot.slane %v236, 1
  %v238 = vadd.f32 %v236, %v237
  %vm239 = vcmask 253952
  %240 = vst.msk [vmem:[%s2] sm:$0x1] %vm239, %v238
  %v241 = vmul.f32 %v139, %v139
  %v242 = vmul.f32 %v142, %v142
  %v243 = vmul.f32 %v147, %v147
  %v244 = vmul.f32 %v150, %v150
  %v245 = vmul.f32 %v155, %v155
  %v246 = vmul.f32 %v158, %v158
  %v247 = vmul.f32 %v163, %v163
  %v248 = vmul.f32 %v166, %v166
  %v249 = vmul.f32 %v171, %v171
  %v250 = vmul.f32 %v174, %v174
  %v251 = vmul.f32 %v179, %v179
  %v252 = vmul.f32 %v182, %v182
  %v253 = vmul.f32 %v187, %v187
  %v254 = vmul.f32 %v190, %v190
  %v255 = vmul.f32 %v195, %v195
  %v256 = vmul.f32 %v198, %v198
  %v257 = vsel %vm201, %v241, 0.0
  %v258 = vsel %vm201, %v242, 0.0
  %v259 = vadd.f32 %v257, %v258
  %v260 = vsel %vm201, %v243, 0.0
  %v261 = vadd.f32 %v259, %v260
  %v262 = vsel %vm201, %v244, 0.0
  %v263 = vadd.f32 %v261, %v262
  %v264 = vsel %vm201, %v245, 0.0
  %v265 = vadd.f32 %v263, %v264
  %v266 = vsel %vm201, %v246, 0.0
  %v267 = vadd.f32 %v265, %v266
  %v268 = vsel %vm201, %v247, 0.0
  %v269 = vadd.f32 %v267, %v268
  %v270 = vsel %vm201, %v248, 0.0
  %v271 = vadd.f32 %v269, %v270
  %v272 = vsel %vm201, %v249, 0.0
  %v273 = vadd.f32 %v271, %v272
  %v274 = vsel %vm201, %v250, 0.0
  %v275 = vadd.f32 %v273, %v274
  %v276 = vsel %vm201, %v251, 0.0
  %v277 = vadd.f32 %v275, %v276
  %v278 = vsel %vm201, %v252, 0.0
  %v279 = vadd.f32 %v277, %v278
  %v280 = vsel %vm201, %v253, 0.0
  %v281 = vadd.f32 %v279, %v280
  %v282 = vsel %vm201, %v254, 0.0
  %v283 = vadd.f32 %v281, %v282
  %v284 = vsel %vm201, %v255, 0.0
  %v285 = vadd.f32 %v283, %v284
  %v286 = vsel %vm201, %v256, 0.0
  %v287 = vadd.f32 %v285, %v286
  %v288 = vrot.slane %v287, 4
  %v289 = vadd.f32 %v287, %v288
  %v290 = vrot.slane %v289, 2
  %v291 = vadd.f32 %v289, %v290
  %v292 = vrot.slane %v291, 1
  %v293 = vadd.f32 %v291, %v292
  %294 = vst.msk [vmem:[%s2 + $0x1] sm:$0x1] %vm239, %v293
  // Predicated region
  $region10: #{pixel_set_encoder.4} parent=0 // pred_check
    _
  $region11: #{pixel_set_encoder.4} parent=0 // pred_check_branch
    %296 = sbr.rel (0) target = $region13
  $region12: #{pixel_set_encoder.4} parent=0 // pred_region
    _
  $region13: #{pixel_set_encoder.4} parent=0 // pred_fallthru
    _
  // Predicated region
  $region14: #{pixel_set_encoder.4} parent=0 // pred_check
    _
  $region15: #{pixel_set_encoder.4} parent=0 // pred_check_branch
    %298 = sbr.rel (0) target = $region17
  $region16: #{pixel_set_encoder.4} parent=0 // pred_region
    _
  $region17: #{pixel_set_encoder.4} parent=0 // pred_fallthru
    _

// kernel: pixel_set_encoder.7
$region0: #{pixel_set_encoder.7}
  #allocation0 [shape = 'u32[]', space=smem, size = 0x4, offset = 0x4, fixed_abs, tag = 'smem constant byte address 0x4 - core index']
  #allocation1 [shape = 'u32[144,128]{1,0:T(1,128)}', space=vmem, size = 0x12000, scoped, tag = 'internal scratch']
  %s0 = inlined_call_operand.vmem [shape: f32[8,128], index: 0, kind: input, shape index: {}, may-alias: {0,2}]
  %s1 = inlined_call_operand.vmem [shape: f32[2,128], index: 1, kind: input, shape index: {}]
  %s2 = inlined_call_operand.vmem [shape: f32[8,128], index: 2, kind: output, shape index: {}, may-alias: {0,2}]
  %s3 = sld [smem:[#allocation0]]
  $region18: #{pixel_set_encoder.7} parent=0
    _
  %s5 = ssub.s32 1, %s3
  %s6 = scalar_select 0, %s5, %s3
  // Predicated region
  $region2: #{pixel_set_encoder.7} parent=0 // pred_check
    _
  $region3: #{pixel_set_encoder.7} parent=0 // pred_check_branch
    %8 = sbr.rel (0) target = $region5
  $region4: #{pixel_set_encoder.7} parent=0 // pred_region
    _
  $region5: #{pixel_set_encoder.7} parent=0 // pred_fallthru
    _
  // Predicated region
  $region6: #{pixel_set_encoder.7} parent=0 // pred_check
    _
  $region7: #{pixel_set_encoder.7} parent=0 // pred_check_branch
    %10 = sbr.rel (0) target = $region9
  $region8: #{pixel_set_encoder.7} parent=0 // pred_region
    _
  $region9: #{pixel_set_encoder.7} parent=0 // pred_fallthru
    _
  %v11 = vld [vmem:[%s0] sm:$0xff]
  %v12 = vld [vmem:[%s1] sm:$0x1]
  %v13 = vlaneseq
  %v14 = vshrl.u32 %v13, 7
  %v15 = vsub.s32 0, %v14
  %v16 = vrot.slane %v12, %v15
  %v17 = vmul.f32 %v11, %v16
  %v18 = vld [vmem:[%s1 + $0x1] sm:$0x1]
  %v19 = vlaneseq
  %v20 = vshrl.u32 %v19, 7
  %v21 = vsub.s32 0, %v20
  %v22 = vrot.slane %v18, %v21
  %v23 = vadd.f32 %v17, %v22
  %24 = vst [vmem:[%s2] sm:$0xff] %v23
  // Predicated region
  $region10: #{pixel_set_encoder.7} parent=0 // pred_check
    _
  $region11: #{pixel_set_encoder.7} parent=0 // pred_check_branch
    %26 = sbr.rel (0) target = $region13
  $region12: #{pixel_set_encoder.7} parent=0 // pred_region
    _
  $region13: #{pixel_set_encoder.7} parent=0 // pred_fallthru
    _
  // Predicated region
  $region14: #{pixel_set_encoder.7} parent=0 // pred_check
    _
  $region15: #{pixel_set_encoder.7} parent=0 // pred_check_branch
    %28 = sbr.rel (0) target = $region17
  $region16: #{pixel_set_encoder.7} parent=0 // pred_region
    _
  $region17: #{pixel_set_encoder.7} parent=0 // pred_fallthru
    _

// kernel: pixel_set_encoder.5
$region0: #{pixel_set_encoder.5}
  #allocation0 [shape = 'u32[]', space=smem, size = 0x4, offset = 0x4, fixed_abs, tag = 'smem constant byte address 0x4 - core index']
  #allocation1 [shape = 'u32[144,128]{1,0:T(1,128)}', space=vmem, size = 0x12000, scoped, tag = 'internal scratch']
  %s0 = inlined_call_operand.vmem [shape: bf16[128,10], index: 0, kind: input, shape index: {}]
  %s1 = inlined_call_operand.vmem [shape: bf16[10,32], index: 1, kind: input, shape index: {}]
  %s2 = inlined_call_operand.vmem [shape: f32[2,32], index: 2, kind: input, shape index: {}]
  %s3 = inlined_call_operand.vmem [shape: f32[32,64], index: 3, kind: input, shape index: {}]
  %s4 = inlined_call_operand.vmem [shape: f32[1,2,64], index: 4, kind: output, shape index: {}]
  %s5 = sld [smem:[#allocation0]]
  $region26: #{pixel_set_encoder.5} parent=0
    _
  %s7 = ssub.s32 1, %s5
  %s8 = scalar_select 0, %s7, %s5
  // Predicated region
  $region2: #{pixel_set_encoder.5} parent=0 // pred_check
    _
  $region3: #{pixel_set_encoder.5} parent=0 // pred_check_branch
    %10 = sbr.rel (0) target = $region5
  $region4: #{pixel_set_encoder.5} parent=0 // pred_region
    _
  $region5: #{pixel_set_encoder.5} parent=0 // pred_fallthru
    _
  // Predicated region
  $region6: #{pixel_set_encoder.5} parent=0 // pred_check
    _
  $region7: #{pixel_set_encoder.5} parent=0 // pred_check_branch
    %12 = sbr.rel (0) target = $region9
  $region8: #{pixel_set_encoder.5} parent=0 // pred_region
    _
  $region9: #{pixel_set_encoder.5} parent=0 // pred_fallthru
    _
  // Predicated region
  $region10: #{pixel_set_encoder.5} parent=0 // pred_check
    _
  $region11: #{pixel_set_encoder.5} parent=0 // pred_check_branch
    %14 = sbr.rel (0) target = $region13
  $region12: #{pixel_set_encoder.5} parent=0 // pred_region
    _
  $region13: #{pixel_set_encoder.5} parent=0 // pred_fallthru
    _
  // Predicated region
  $region14: #{pixel_set_encoder.5} parent=0 // pred_check
    _
  $region15: #{pixel_set_encoder.5} parent=0 // pred_check_branch
    %16 = sbr.rel (0) target = $region17
  $region16: #{pixel_set_encoder.5} parent=0 // pred_region
    _
  $region17: #{pixel_set_encoder.5} parent=0 // pred_fallthru
    _
  %v18 = vld [vmem:[%s0] sm:$0xf]
  %v19 = vld [vmem:[%s0 + $0x4] sm:$0xf]
  %v20 = vld [vmem:[%s0 + $0x8] sm:$0xf]
  %v21 = vld [vmem:[%s0 + $0xc] sm:$0xf]
  %v22 = vld [vmem:[%s0 + $0x10] sm:$0xf]
  %v23 = vld [vmem:[%s0 + $0x14] sm:$0xf]
  %v24 = vld [vmem:[%s0 + $0x18] sm:$0xf]
  %v25 = vld [vmem:[%s0 + $0x1c] sm:$0xf]
  %v26 = vld [vmem:[%s0 + $0x20] sm:$0xf]
  %v27 = vld [vmem:[%s0 + $0x24] sm:$0xf]
  %v28 = vld [vmem:[%s0 + $0x28] sm:$0xf]
  %v29 = vld [vmem:[%s0 + $0x2c] sm:$0xf]
  %v30 = vld [vmem:[%s0 + $0x30] sm:$0xf]
  %v31 = vld [vmem:[%s0 + $0x34] sm:$0xf]
  %v32 = vld [vmem:[%s0 + $0x38] sm:$0xf]
  %v33 = vld [vmem:[%s0 + $0x3c] sm:$0xf]
  %v34 = vld [vmem:[%s1] sm:$0xf]
  %v35 = vld [vmem:[%s1 + $0x4] sm:$0x1]
  %v52 = vunpack.c.l.b16 %v18
  %v53 = vunpack.c.l.b16 %v19
  %v54 = vunpack.c.l.b16 %v20
  %v55 = vunpack.c.l.b16 %v21
  %v56 = vunpack.c.l.b16 %v22
  %v57 = vunpack.c.l.b16 %v23
  %v58 = vunpack.c.l.b16 %v24
  %v59 = vunpack.c.l.b16 %v25
  %v60 = vunpack.c.l.b16 %v26
  %v61 = vunpack.c.l.b16 %v27
  %v62 = vunpack.c.l.b16 %v28
  %v63 = vunpack.c.l.b16 %v29
  %v64 = vunpack.c.l.b16 %v30
  %v65 = vunpack.c.l.b16 %v31
  %v66 = vunpack.c.l.b16 %v32
  %v67 = vunpack.c.l.b16 %v33
  %v68 = vpack.c.b16 %v53, %v52
  %v69 = vpack.c.b16 %v55, %v54
  %v70 = vpack.c.b16 %v57, %v56
  %v71 = vpack.c.b16 %v59, %v58
  %v72 = vpack.c.b16 %v61, %v60
  %v73 = vpack.c.b16 %v63, %v62
  %v74 = vpack.c.b16 %v65, %v64
  %v75 = vpack.c.b16 %v67, %v66
  %v78 = vunpack.c.l.b16 %v34
  %v79 = vunpack.c.l.b16 %v35
  %v80 = vpack.c.b16 %v79, %v78
  %vm81 = vcmask 80896
  %v83 = vsel %vm81, %v68, 0
  %v86 = vsel %vm81, %v69, 0
  %v89 = vsel %vm81, %v70, 0
  %v92 = vsel %vm81, %v71, 0
  %v95 = vsel %vm81, %v72, 0
  %v98 = vsel %vm81, %v73, 0
  %v101 = vsel %vm81, %v74, 0
  %v104 = vsel %vm81, %v75, 0
  %vm106 = vcmask 1044480
  %v108 = vsel %vm106, %v80, 0
  %110 = vmatprep.subr.bf16.mxu0 0
  %111 = vmatpush1.bf16.msra.mxu0 %v108
  %112 = vmatprep.subr.bf16.mxu0 0
  %113 = vmatpush1.bf16.msra.mxu0 0
  %114 = vmatprep.subr.bf16.mxu0 0
  %115 = vmatpush1.bf16.msra.mxu0 0
  %116 = vmatprep.subr.bf16.mxu0 0
  %117 = vmatpush1.bf16.msra.mxu0 0
  %118 = vmatprep.subr.bf16.mxu0 0
  %119 = vmatpush1.bf16.msra.mxu0 0
  %120 = vmatprep.subr.bf16.mxu0 0
  %121 = vmatpush1.bf16.msra.mxu0 0
  %122 = vmatprep.subr.bf16.mxu0 0
  %123 = vmatpush1.bf16.msra.mxu0 0
  %124 = vmatprep.subr.bf16.mxu0 0
  %125 = vmatpush1.bf16.msra.mxu0 0
  %126 = vmatprep.subr.bf16.mxu0 0
  %127 = vmatpush1.bf16.msra.mxu0 0
  %128 = vmatprep.subr.bf16.mxu0 0
  %129 = vmatpush1.bf16.msra.mxu0 0
  %130 = vmatprep.subr.bf16.mxu0 0
  %131 = vmatpush1.bf16.msra.mxu0 0
  %132 = vmatprep.subr.bf16.mxu0 0
  %133 = vmatpush1.bf16.msra.mxu0 0
  %134 = vmatprep.subr.bf16.mxu0 0
  %135 = vmatpush1.bf16.msra.mxu0 0
  %136 = vmatprep.subr.bf16.mxu0 0
  %137 = vmatpush1.bf16.msra.mxu0 0
  %138 = vmatprep.subr.bf16.mxu0 0
  %139 = vmatpush1.bf16.msra.mxu0 0
  %140 = vmatprep.subr.bf16.mxu0 0
  %141 = vmatpush1.bf16.msra.mxu0 0
  %142 = vmatprep.mubr.bf16.mxu0 0
  %143 = vmatmul.mubr.bf16.gmra.mrb[0].mxu0 %v83
  %v144 = vpop.f32.mrb[0].mxu0
  %v145 = vadd.f32 0.0, %v144
  %v146 = vpop.f32.mrb[0].mxu0
  %v147 = vpop.f32.mrb[0].mxu0
  %v148 = vadd.f32 0.0, %v147
  %v149 = vpop.f32.mrb[0].mxu0
  %150 = vmatprep.mubr.bf16.mxu0 0
  %151 = vmatmul.mubr.bf16.gmra.mrb[0].mxu0 %v86
  %v152 = vpop.f32.mrb[0].mxu0
  %v153 = vadd.f32 0.0, %v152
  %v154 = vpop.f32.mrb[0].mxu0
  %v155 = vpop.f32.mrb[0].mxu0
  %v156 = vadd.f32 0.0, %v155
  %v157 = vpop.f32.mrb[0].mxu0
  %158 = vmatprep.mubr.bf16.mxu0 0
  %159 = vmatmul.mubr.bf16.gmra.mrb[0].mxu0 %v89
  %v160 = vpop.f32.mrb[0].mxu0
  %v161 = vadd.f32 0.0, %v160
  %v162 = vpop.f32.mrb[0].mxu0
  %v163 = vpop.f32.mrb[0].mxu0
  %v164 = vadd.f32 0.0, %v163
  %v165 = vpop.f32.mrb[0].mxu0
  %166 = vmatprep.mubr.bf16.mxu0 0
  %167 = vmatmul.mubr.bf16.gmra.mrb[0].mxu0 %v92
  %v168 = vpop.f32.mrb[0].mxu0
  %v169 = vadd.f32 0.0, %v168
  %v170 = vpop.f32.mrb[0].mxu0
  %v171 = vpop.f32.mrb[0].mxu0
  %v172 = vadd.f32 0.0, %v171
  %v173 = vpop.f32.mrb[0].mxu0
  %174 = vmatprep.mubr.bf16.mxu0 0
  %175 = vmatmul.mubr.bf16.gmra.mrb[0].mxu0 %v95
  %v176 = vpop.f32.mrb[0].mxu0
  %v177 = vadd.f32 0.0, %v176
  %v178 = vpop.f32.mrb[0].mxu0
  %v179 = vpop.f32.mrb[0].mxu0
  %v180 = vadd.f32 0.0, %v179
  %v181 = vpop.f32.mrb[0].mxu0
  %182 = vmatprep.mubr.bf16.mxu0 0
  %183 = vmatmul.mubr.bf16.gmra.mrb[0].mxu0 %v98
  %v184 = vpop.f32.mrb[0].mxu0
  %v185 = vadd.f32 0.0, %v184
  %v186 = vpop.f32.mrb[0].mxu0
  %v187 = vpop.f32.mrb[0].mxu0
  %v188 = vadd.f32 0.0, %v187
  %v189 = vpop.f32.mrb[0].mxu0
  %190 = vmatprep.mubr.bf16.mxu0 0
  %191 = vmatmul.mubr.bf16.gmra.mrb[0].mxu0 %v101
  %v192 = vpop.f32.mrb[0].mxu0
  %v193 = vadd.f32 0.0, %v192
  %v194 = vpop.f32.mrb[0].mxu0
  %v195 = vpop.f32.mrb[0].mxu0
  %v196 = vadd.f32 0.0, %v195
  %v197 = vpop.f32.mrb[0].mxu0
  %198 = vmatprep.mubr.bf16.mxu0 0
  %199 = vmatmul.mubr.bf16.gmra.mrb[0].mxu0 %v104
  %v200 = vpop.f32.mrb[0].mxu0
  %v201 = vadd.f32 0.0, %v200
  %v202 = vpop.f32.mrb[0].mxu0
  %v203 = vpop.f32.mrb[0].mxu0
  %v204 = vadd.f32 0.0, %v203
  %v205 = vpop.f32.mrb[0].mxu0
  %206 = vdwg.mxu0
  %v207 = vld [vmem:[%s2] sm:$0x1]
  %v208 = vlaneseq
  %v209 = vshrl.u32 %v208, 7
  %v210 = vsub.s32 0, %v209
  %v211 = vrot.slane %v207, %v210
  %v212 = vmul.f32 %v145, %v211
  %v213 = vmul.f32 %v148, %v211
  %v214 = vmul.f32 %v153, %v211
  %v215 = vmul.f32 %v156, %v211
  %v216 = vmul.f32 %v161, %v211
  %v217 = vmul.f32 %v164, %v211
  %v218 = vmul.f32 %v169, %v211
  %v219 = vmul.f32 %v172, %v211
  %v220 = vmul.f32 %v177, %v211
  %v221 = vmul.f32 %v180, %v211
  %v222 = vmul.f32 %v185, %v211
  %v223 = vmul.f32 %v188, %v211
  %v224 = vmul.f32 %v193, %v211
  %v225 = vmul.f32 %v196, %v211
  %v226 = vmul.f32 %v201, %v211
  %v227 = vmul.f32 %v204, %v211
  %v228 = vld [vmem:[%s2 + $0x1] sm:$0x1]
  %v229 = vlaneseq
  %v230 = vshrl.u32 %v229, 7
  %v231 = vsub.s32 0, %v230
  %v232 = vrot.slane %v228, %v231
  %v233 = vadd.f32 %v212, %v232
  %v234 = vadd.f32 %v213, %v232
  %v235 = vadd.f32 %v214, %v232
  %v236 = vadd.f32 %v215, %v232
  %v237 = vadd.f32 %v216, %v232
  %v238 = vadd.f32 %v217, %v232
  %v239 = vadd.f32 %v218, %v232
  %v240 = vadd.f32 %v219, %v232
  %v241 = vadd.f32 %v220, %v232
  %v242 = vadd.f32 %v221, %v232
  %v243 = vadd.f32 %v222, %v232
  %v244 = vadd.f32 %v223, %v232
  %v245 = vadd.f32 %v224, %v232
  %v246 = vadd.f32 %v225, %v232
  %v247 = vadd.f32 %v226, %v232
  %v248 = vadd.f32 %v227, %v232
  %v249 = vmax.f32 %v233, 0.0
  %v250 = vmax.f32 %v234, 0.0
  %v251 = vmax.f32 %v235, 0.0
  %v252 = vmax.f32 %v236, 0.0
  %v253 = vmax.f32 %v237, 0.0
  %v254 = vmax.f32 %v238, 0.0
  %v255 = vmax.f32 %v239, 0.0
  %v256 = vmax.f32 %v240, 0.0
  %v257 = vmax.f32 %v241, 0.0
  %v258 = vmax.f32 %v242, 0.0
  %v259 = vmax.f32 %v243, 0.0
  %v260 = vmax.f32 %v244, 0.0
  %v261 = vmax.f32 %v245, 0.0
  %v262 = vmax.f32 %v246, 0.0
  %v263 = vmax.f32 %v247, 0.0
  %v264 = vmax.f32 %v248, 0.0
  %v265 = vld [vmem:[%s3] sm:$0xff]
  %v266 = vld [vmem:[%s3 + $0x8] sm:$0xff]
  %v267 = vld [vmem:[%s3 + $0x10] sm:$0xff]
  %v268 = vld [vmem:[%s3 + $0x18] sm:$0xff]
  %vm269 = vcmask 261120
  %v271 = vsel %vm269, %v249, 0
  %v274 = vsel %vm269, %v250, 0
  %v277 = vsel %vm269, %v251, 0
  %v280 = vsel %vm269, %v252, 0
  %v283 = vsel %vm269, %v253, 0
  %v286 = vsel %vm269, %v254, 0
  %v289 = vsel %vm269, %v255, 0
  %v292 = vsel %vm269, %v256, 0
  %v295 = vsel %vm269, %v257, 0
  %v298 = vsel %vm269, %v258, 0
  %v301 = vsel %vm269, %v259, 0
  %v304 = vsel %vm269, %v260, 0
  %v307 = vsel %vm269, %v261, 0
  %v310 = vsel %vm269, %v262, 0
  %v313 = vsel %vm269, %v263, 0
  %v316 = vsel %vm269, %v264, 0
  %318 = vmatprep.subr.mxu0 0.0
  %319 = vmatpush1.msra.mxu0 %v265
  %320 = vmatprep.subr.mxu0 0.0
  %321 = vmatpush1.msra.mxu0 %v266
  %322 = vmatprep.subr.mxu0 0.0
  %323 = vmatpush1.msra.mxu0 %v267
  %324 = vmatprep.subr.mxu0 0.0
  %325 = vmatpush1.msra.mxu0 %v268
  %326 = vmatprep.subr.mxu0 0.0
  %327 = vmatpush1.msra.mxu0 0.0
  %328 = vmatprep.subr.mxu0 0.0
  %329 = vmatpush1.msra.mxu0 0.0
  %330 = vmatprep.subr.mxu0 0.0
  %331 = vmatpush1.msra.mxu0 0.0
  %332 = vmatprep.subr.mxu0 0.0
  %333 = vmatpush1.msra.mxu0 0.0
  %334 = vmatprep.subr.mxu0 0.0
  %335 = vmatpush1.msra.mxu0 0.0
  %336 = vmatprep.subr.mxu0 0.0
  %337 = vmatpush1.msra.mxu0 0.0
  %338 = vmatprep.subr.mxu0 0.0
  %339 = vmatpush1.msra.mxu0 0.0
  %340 = vmatprep.subr.mxu0 0.0
  %341 = vmatpush1.msra.mxu0 0.0
  %342 = vmatprep.subr.mxu0 0.0
  %343 = vmatpush1.msra.mxu0 0.0
  %344 = vmatprep.subr.mxu0 0.0
  %345 = vmatpush1.msra.mxu0 0.0
  %346 = vmatprep.subr.mxu0 0.0
  %347 = vmatpush1.msra.mxu0 0.0
  %348 = vmatprep.subr.mxu0 0.0
  %349 = vmatpush1.msra.mxu0 0.0
  %350 = vmatprep.subr.mxu0 0.0
  %351 = vmatpush1.msra.mxu0 0.0
  %352 = vmatprep.subr.mxu0 0.0
  %353 = vmatpush1.msra.mxu0 0.0
  %354 = vmatprep.subr.mxu0 0.0
  %355 = vmatpush1.msra.mxu0 0.0
  %356 = vmatprep.subr.mxu0 0.0
  %357 = vmatpush1.msra.mxu0 0.0
  %358 = vmatprep.subr.mxu0 0.0
  %359 = vmatpush1.msra.mxu0 0.0
  %360 = vmatprep.subr.mxu0 0.0
  %361 = vmatpush1.msra.mxu0 0.0
  %362 = vmatprep.subr.mxu0 0.0
  %363 = vmatpush1.msra.mxu0 0.0
  %364 = vmatprep.subr.mxu0 0.0
  %365 = vmatpush1.msra.mxu0 0.0
  %366 = vmatprep.subr.mxu0 0.0
  %367 = vmatpush1.msra.mxu0 0.0
  %368 = vmatprep.subr.mxu0 0.0
  %369 = vmatpush1.msra.mxu0 0.0
  %370 = vmatprep.subr.mxu0 0.0
  %371 = vmatpush1.msra.mxu0 0.0
  %372 = vmatprep.subr.mxu0 0.0
  %373 = vmatpush1.msra.mxu0 0.0
  %374 = vmatprep.subr.mxu0 0.0
  %375 = vmatpush1.msra.mxu0 0.0
  %376 = vmatprep.subr.mxu0 0.0
  %377 = vmatpush1.msra.mxu0 0.0
  %378 = vmatprep.subr.mxu0 0.0
  %379 = vmatpush1.msra.mxu0 0.0
  %380 = vmatprep.subr.mxu0 0.0
  %381 = vmatpush1.msra.mxu0 0.0
  %382 = vmatprep.mubr.f32.mxu0 0.0
  %383 = vmatmul.mubr.f32.gmra.mrb[0].mxu0 %v271
  %v384 = vpop.f32.mrb[0].mxu0
  %v385 = vadd.f32 0.0, %v384
  %v386 = vpop.f32.mrb[0].mxu0
  %387 = vmatprep.mubr.f32.mxu0 0.0
  %388 = vmatmul.mubr.f32.gmra.mrb[0].mxu0 %v274
  %v389 = vpop.f32.mrb[0].mxu0
  %v390 = vadd.f32 0.0, %v389
  %v391 = vpop.f32.mrb[0].mxu0
  %392 = vmatprep.mubr.f32.mxu0 0.0
  %393 = vmatmul.mubr.f32.gmra.mrb[0].mxu0 %v277
  %v394 = vpop.f32.mrb[0].mxu0
  %v395 = vadd.f32 0.0, %v394
  %v396 = vpop.f32.mrb[0].mxu0
  %397 = vmatprep.mubr.f32.mxu0 0.0
  %398 = vmatmul.mubr.f32.gmra.mrb[0].mxu0 %v280
  %v399 = vpop.f32.mrb[0].mxu0
  %v400 = vadd.f32 0.0, %v399
  %v401 = vpop.f32.mrb[0].mxu0
  %402 = vmatprep.mubr.f32.mxu0 0.0
  %403 = vmatmul.mubr.f32.gmra.mrb[0].mxu0 %v283
  %v404 = vpop.f32.mrb[0].mxu0
  %v405 = vadd.f32 0.0, %v404
  %v406 = vpop.f32.mrb[0].mxu0
  %407 = vmatprep.mubr.f32.mxu0 0.0
  %408 = vmatmul.mubr.f32.gmra.mrb[0].mxu0 %v286
  %v409 = vpop.f32.mrb[0].mxu0
  %v410 = vadd.f32 0.0, %v409
  %v411 = vpop.f32.mrb[0].mxu0
  %412 = vmatprep.mubr.f32.mxu0 0.0
  %413 = vmatmul.mubr.f32.gmra.mrb[0].mxu0 %v289
  %v414 = vpop.f32.mrb[0].mxu0
  %v415 = vadd.f32 0.0, %v414
  %v416 = vpop.f32.mrb[0].mxu0
  %417 = vmatprep.mubr.f32.mxu0 0.0
  %418 = vmatmul.mubr.f32.gmra.mrb[0].mxu0 %v292
  %v419 = vpop.f32.mrb[0].mxu0
  %v420 = vadd.f32 0.0, %v419
  %v421 = vpop.f32.mrb[0].mxu0
  %422 = vmatprep.mubr.f32.mxu0 0.0
  %423 = vmatmul.mubr.f32.gmra.mrb[0].mxu0 %v295
  %v424 = vpop.f32.mrb[0].mxu0
  %v425 = vadd.f32 0.0, %v424
  %v426 = vpop.f32.mrb[0].mxu0
  %427 = vmatprep.mubr.f32.mxu0 0.0
  %428 = vmatmul.mubr.f32.gmra.mrb[0].mxu0 %v298
  %v429 = vpop.f32.mrb[0].mxu0
  %v430 = vadd.f32 0.0, %v429
  %v431 = vpop.f32.mrb[0].mxu0
  %432 = vmatprep.mubr.f32.mxu0 0.0
  %433 = vmatmul.mubr.f32.gmra.mrb[0].mxu0 %v301
  %v434 = vpop.f32.mrb[0].mxu0
  %v435 = vadd.f32 0.0, %v434
  %v436 = vpop.f32.mrb[0].mxu0
  %437 = vmatprep.mubr.f32.mxu0 0.0
  %438 = vmatmul.mubr.f32.gmra.mrb[0].mxu0 %v304
  %v439 = vpop.f32.mrb[0].mxu0
  %v440 = vadd.f32 0.0, %v439
  %v441 = vpop.f32.mrb[0].mxu0
  %442 = vmatprep.mubr.f32.mxu0 0.0
  %443 = vmatmul.mubr.f32.gmra.mrb[0].mxu0 %v307
  %v444 = vpop.f32.mrb[0].mxu0
  %v445 = vadd.f32 0.0, %v444
  %v446 = vpop.f32.mrb[0].mxu0
  %447 = vmatprep.mubr.f32.mxu0 0.0
  %448 = vmatmul.mubr.f32.gmra.mrb[0].mxu0 %v310
  %v449 = vpop.f32.mrb[0].mxu0
  %v450 = vadd.f32 0.0, %v449
  %v451 = vpop.f32.mrb[0].mxu0
  %452 = vmatprep.mubr.f32.mxu0 0.0
  %453 = vmatmul.mubr.f32.gmra.mrb[0].mxu0 %v313
  %v454 = vpop.f32.mrb[0].mxu0
  %v455 = vadd.f32 0.0, %v454
  %v456 = vpop.f32.mrb[0].mxu0
  %457 = vmatprep.mubr.f32.mxu0 0.0
  %458 = vmatmul.mubr.f32.gmra.mrb[0].mxu0 %v316
  %v459 = vpop.f32.mrb[0].mxu0
  %v460 = vadd.f32 0.0, %v459
  %v461 = vpop.f32.mrb[0].mxu0
  %462 = vdwg.mxu0
  %vm463 = vcmask 523264
  %v464 = vsel %vm463, %v385, 0.0
  %v465 = vsel %vm463, %v390, 0.0
  %v466 = vadd.f32 %v464, %v465
  %v467 = vsel %vm463, %v395, 0.0
  %v468 = vadd.f32 %v466, %v467
  %v469 = vsel %vm463, %v400, 0.0
  %v470 = vadd.f32 %v468, %v469
  %v471 = vsel %vm463, %v405, 0.0
  %v472 = vadd.f32 %v470, %v471
  %v473 = vsel %vm463, %v410, 0.0
  %v474 = vadd.f32 %v472, %v473
  %v475 = vsel %vm463, %v415, 0.0
  %v476 = vadd.f32 %v474, %v475
  %v477 = vsel %vm463, %v420, 0.0
  %v478 = vadd.f32 %v476, %v477
  %v479 = vsel %vm463, %v425, 0.0
  %v480 = vadd.f32 %v478, %v479
  %v481 = vsel %vm463, %v430, 0.0
  %v482 = vadd.f32 %v480, %v481
  %v483 = vsel %vm463, %v435, 0.0
  %v484 = vadd.f32 %v482, %v483
  %v485 = vsel %vm463, %v440, 0.0
  %v486 = vadd.f32 %v484, %v485
  %v487 = vsel %vm463, %v445, 0.0
  %v488 = vadd.f32 %v486, %v487
  %v489 = vsel %vm463, %v450, 0.0
  %v490 = vadd.f32 %v488, %v489
  %v491 = vsel %vm463, %v455, 0.0
  %v492 = vadd.f32 %v490, %v491
  %v493 = vsel %vm463, %v460, 0.0
  %v494 = vadd.f32 %v492, %v493
  %v495 = vrot.slane %v494, 4
  %v496 = vadd.f32 %v494, %v495
  %v497 = vrot.slane %v496, 2
  %v498 = vadd.f32 %v496, %v497
  %v499 = vrot.slane %v498, 1
  %v500 = vadd.f32 %v498, %v499
  %vm501 = vcmask 516096
  %502 = vst.msk [vmem:[%s4] sm:$0x1] %vm501, %v500
  %v503 = vmul.f32 %v385, %v385
  %v504 = vmul.f32 %v390, %v390
  %v505 = vmul.f32 %v395, %v395
  %v506 = vmul.f32 %v400, %v400
  %v507 = vmul.f32 %v405, %v405
  %v508 = vmul.f32 %v410, %v410
  %v509 = vmul.f32 %v415, %v415
  %v510 = vmul.f32 %v420, %v420
  %v511 = vmul.f32 %v425, %v425
  %v512 = vmul.f32 %v430, %v430
  %v513 = vmul.f32 %v435, %v435
  %v514 = vmul.f32 %v440, %v440
  %v515 = vmul.f32 %v445, %v445
  %v516 = vmul.f32 %v450, %v450
  %v517 = vmul.f32 %v455, %v455
  %v518 = vmul.f32 %v460, %v460
  %v519 = vsel %vm463, %v503, 0.0
  %v520 = vsel %vm463, %v504, 0.0
  %v521 = vadd.f32 %v519, %v520
  %v522 = vsel %vm463, %v505, 0.0
  %v523 = vadd.f32 %v521, %v522
  %v524 = vsel %vm463, %v506, 0.0
  %v525 = vadd.f32 %v523, %v524
  %v526 = vsel %vm463, %v507, 0.0
  %v527 = vadd.f32 %v525, %v526
  %v528 = vsel %vm463, %v508, 0.0
  %v529 = vadd.f32 %v527, %v528
  %v530 = vsel %vm463, %v509, 0.0
  %v531 = vadd.f32 %v529, %v530
  %v532 = vsel %vm463, %v510, 0.0
  %v533 = vadd.f32 %v531, %v532
  %v534 = vsel %vm463, %v511, 0.0
  %v535 = vadd.f32 %v533, %v534
  %v536 = vsel %vm463, %v512, 0.0
  %v537 = vadd.f32 %v535, %v536
  %v538 = vsel %vm463, %v513, 0.0
  %v539 = vadd.f32 %v537, %v538
  %v540 = vsel %vm463, %v514, 0.0
  %v541 = vadd.f32 %v539, %v540
  %v542 = vsel %vm463, %v515, 0.0
  %v543 = vadd.f32 %v541, %v542
  %v544 = vsel %vm463, %v516, 0.0
  %v545 = vadd.f32 %v543, %v544
  %v546 = vsel %vm463, %v517, 0.0
  %v547 = vadd.f32 %v545, %v546
  %v548 = vsel %vm463, %v518, 0.0
  %v549 = vadd.f32 %v547, %v548
  %v550 = vrot.slane %v549, 4
  %v551 = vadd.f32 %v549, %v550
  %v552 = vrot.slane %v551, 2
  %v553 = vadd.f32 %v551, %v552
  %v554 = vrot.slane %v553, 1
  %v555 = vadd.f32 %v553, %v554
  %556 = vst.msk [vmem:[%s4 + $0x1] sm:$0x1] %vm501, %v555
  // Predicated region
  $region18: #{pixel_set_encoder.5} parent=0 // pred_check
    _
  $region19: #{pixel_set_encoder.5} parent=0 // pred_check_branch
    %558 = sbr.rel (0) target = $region21
  $region20: #{pixel_set_encoder.5} parent=0 // pred_region
    _
  $region21: #{pixel_set_encoder.5} parent=0 // pred_fallthru
    _
  // Predicated region
  $region22: #{pixel_set_encoder.5} parent=0 // pred_check
    _
  $region23: #{pixel_set_encoder.5} parent=0 // pred_check_branch
    %560 = sbr.rel (0) target = $region25
  $region24: #{pixel_set_encoder.5} parent=0 // pred_region
    _
  $region25: #{pixel_set_encoder.5} parent=0 // pred_fallthru
    _

// kernel: pixel_set_encoder.6
$region0: #{pixel_set_encoder.6}
  #allocation0 [shape = 'u32[]', space=smem, size = 0x4, offset = 0x4, fixed_abs, tag = 'smem constant byte address 0x4 - core index']
  #allocation1 [shape = 'u32[144,128]{1,0:T(1,128)}', space=vmem, size = 0x12000, scoped, tag = 'internal scratch']
  %s0 = inlined_call_operand.vmem [shape: bf16[128,10], index: 0, kind: input, shape index: {}]
  %s1 = inlined_call_operand.vmem [shape: f32[8,16], index: 1, kind: input, shape index: {}]
  %s2 = inlined_call_operand.vmem [shape: f32[8,4], index: 2, kind: input, shape index: {}]
  %s3 = inlined_call_operand.vmem [shape: bf16[10,32], index: 3, kind: input, shape index: {}]
  %s4 = inlined_call_operand.vmem [shape: f32[2,32], index: 4, kind: input, shape index: {}]
  %s5 = inlined_call_operand.vmem [shape: f32[32,64], index: 5, kind: input, shape index: {}]
  %s6 = inlined_call_operand.vmem [shape: f32[2,64], index: 6, kind: input, shape index: {}]
  %s7 = inlined_call_operand.vmem [shape: f32[132,128], index: 7, kind: input, shape index: {}]
  %s8 = inlined_call_operand.vmem [shape: f32[8,128], index: 8, kind: output, shape index: {0}]
  %s9 = inlined_call_operand.vmem [shape: f32[1,2,128], index: 9, kind: output, shape index: {1}]
  %10 = xla_tuple %s8, %s9
  %s11 = sld [smem:[#allocation0]]
  $region50: #{pixel_set_encoder.6} parent=0
    _
  %s13 = ssub.s32 1, %s11
  %s14 = scalar_select 0, %s13, %s11
  // Predicated region
  $region2: #{pixel_set_encoder.6} parent=0 // pred_check
    _
  $region3: #{pixel_set_encoder.6} parent=0 // pred_check_branch
    %16 = sbr.rel (0) target = $region5
  $region4: #{pixel_set_encoder.6} parent=0 // pred_region
    _
  $region5: #{pixel_set_encoder.6} parent=0 // pred_fallthru
    _
  // Predicated region
  $region6: #{pixel_set_encoder.6} parent=0 // pred_check
    _
  $region7: #{pixel_set_encoder.6} parent=0 // pred_check_branch
    %18 = sbr.rel (0) target = $region9
  $region8: #{pixel_set_encoder.6} parent=0 // pred_region
    _
  $region9: #{pixel_set_encoder.6} parent=0 // pred_fallthru
    _
  // Predicated region
  $region10: #{pixel_set_encoder.6} parent=0 // pred_check
    _
  $region11: #{pixel_set_encoder.6} parent=0 // pred_check_branch
    %20 = sbr.rel (0) target = $region13
  $region12: #{pixel_set_encoder.6} parent=0 // pred_region
    _
  $region13: #{pixel_set_encoder.6} parent=0 // pred_fallthru
    _
  // Predicated region
  $region14: #{pixel_set_encoder.6} parent=0 // pred_check
    _
  $region15: #{pixel_set_encoder.6} parent=0 // pred_check_branch
    %22 = sbr.rel (0) target = $region17
  $region16: #{pixel_set_encoder.6} parent=0 // pred_region
    _
  $region17: #{pixel_set_encoder.6} parent=0 // pred_fallthru
    _
  // Predicated region
  $region18: #{pixel_set_encoder.6} parent=0 // pred_check
    _
  $region19: #{pixel_set_encoder.6} parent=0 // pred_check_branch
    %24 = sbr.rel (0) target = $region21
  $region20: #{pixel_set_encoder.6} parent=0 // pred_region
    _
  $region21: #{pixel_set_encoder.6} parent=0 // pred_fallthru
    _
  // Predicated region
  $region22: #{pixel_set_encoder.6} parent=0 // pred_check
    _
  $region23: #{pixel_set_encoder.6} parent=0 // pred_check_branch
    %26 = sbr.rel (0) target = $region25
  $region24: #{pixel_set_encoder.6} parent=0 // pred_region
    _
  $region25: #{pixel_set_encoder.6} parent=0 // pred_fallthru
    _
  // Predicated region
  $region26: #{pixel_set_encoder.6} parent=0 // pred_check
    _
  $region27: #{pixel_set_encoder.6} parent=0 // pred_check_branch
    %28 = sbr.rel (0) target = $region29
  $region28: #{pixel_set_encoder.6} parent=0 // pred_region
    _
  $region29: #{pixel_set_encoder.6} parent=0 // pred_fallthru
    _
  // Predicated region
  $region30: #{pixel_set_encoder.6} parent=0 // pred_check
    _
  $region31: #{pixel_set_encoder.6} parent=0 // pred_check_branch
    %30 = sbr.rel (0) target = $region33
  $region32: #{pixel_set_encoder.6} parent=0 // pred_region
    _
  $region33: #{pixel_set_encoder.6} parent=0 // pred_fallthru
    _
  %v32 = vld [vmem:[%s0] sm:$0xf]
  %v33 = vld [vmem:[%s0 + $0x4] sm:$0xf]
  %v34 = vld [vmem:[%s0 + $0x8] sm:$0xf]
  %v35 = vld [vmem:[%s0 + $0xc] sm:$0xf]
  %v36 = vld [vmem:[%s0 + $0x10] sm:$0xf]
  %v37 = vld [vmem:[%s0 + $0x14] sm:$0xf]
  %v38 = vld [vmem:[%s0 + $0x18] sm:$0xf]
  %v39 = vld [vmem:[%s0 + $0x1c] sm:$0xf]
  %v40 = vld [vmem:[%s0 + $0x20] sm:$0xf]
  %v41 = vld [vmem:[%s0 + $0x24] sm:$0xf]
  %v42 = vld [vmem:[%s0 + $0x28] sm:$0xf]
  %v43 = vld [vmem:[%s0 + $0x2c] sm:$0xf]
  %v44 = vld [vmem:[%s0 + $0x30] sm:$0xf]
  %v45 = vld [vmem:[%s0 + $0x34] sm:$0xf]
  %v46 = vld [vmem:[%s0 + $0x38] sm:$0xf]
  %v47 = vld [vmem:[%s0 + $0x3c] sm:$0xf]
  %v48 = vld [vmem:[%s3] sm:$0xf]
  %v49 = vld [vmem:[%s3 + $0x4] sm:$0x1]
  %v66 = vunpack.c.l.b16 %v32
  %v67 = vunpack.c.l.b16 %v33
  %v68 = vunpack.c.l.b16 %v34
  %v69 = vunpack.c.l.b16 %v35
  %v70 = vunpack.c.l.b16 %v36
  %v71 = vunpack.c.l.b16 %v37
  %v72 = vunpack.c.l.b16 %v38
  %v73 = vunpack.c.l.b16 %v39
  %v74 = vunpack.c.l.b16 %v40
  %v75 = vunpack.c.l.b16 %v41
  %v76 = vunpack.c.l.b16 %v42
  %v77 = vunpack.c.l.b16 %v43
  %v78 = vunpack.c.l.b16 %v44
  %v79 = vunpack.c.l.b16 %v45
  %v80 = vunpack.c.l.b16 %v46
  %v81 = vunpack.c.l.b16 %v47
  %v82 = vpack.c.b16 %v67, %v66
  %v83 = vpack.c.b16 %v69, %v68
  %v84 = vpack.c.b16 %v71, %v70
  %v85 = vpack.c.b16 %v73, %v72
  %v86 = vpack.c.b16 %v75, %v74
  %v87 = vpack.c.b16 %v77, %v76
  %v88 = vpack.c.b16 %v79, %v78
  %v89 = vpack.c.b16 %v81, %v80
  %v92 = vunpack.c.l.b16 %v48
  %v93 = vunpack.c.l.b16 %v49
  %v94 = vpack.c.b16 %v93, %v92
  %vm95 = vcmask 80896
  %v97 = vsel %vm95, %v82, 0
  %v100 = vsel %vm95, %v83, 0
  %v103 = vsel %vm95, %v84, 0
  %v106 = vsel %vm95, %v85, 0
  %v109 = vsel %vm95, %v86, 0
  %v112 = vsel %vm95, %v87, 0
  %v115 = vsel %vm95, %v88, 0
  %v118 = vsel %vm95, %v89, 0
  %vm120 = vcmask 1044480
  %v122 = vsel %vm120, %v94, 0
  %124 = vmatprep.subr.bf16.mxu0 0
  %125 = vmatpush1.bf16.msra.mxu0 %v122
  %126 = vmatprep.subr.bf16.mxu0 0
  %127 = vmatpush1.bf16.msra.mxu0 0
  %128 = vmatprep.subr.bf16.mxu0 0
  %129 = vmatpush1.bf16.msra.mxu0 0
  %130 = vmatprep.subr.bf16.mxu0 0
  %131 = vmatpush1.bf16.msra.mxu0 0
  %132 = vmatprep.subr.bf16.mxu0 0
  %133 = vmatpush1.bf16.msra.mxu0 0
  %134 = vmatprep.subr.bf16.mxu0 0
  %135 = vmatpush1.bf16.msra.mxu0 0
  %136 = vmatprep.subr.bf16.mxu0 0
  %137 = vmatpush1.bf16.msra.mxu0 0
  %138 = vmatprep.subr.bf16.mxu0 0
  %139 = vmatpush1.bf16.msra.mxu0 0
  %140 = vmatprep.subr.bf16.mxu0 0
  %141 = vmatpush1.bf16.msra.mxu0 0
  %142 = vmatprep.subr.bf16.mxu0 0
  %143 = vmatpush1.bf16.msra.mxu0 0
  %144 = vmatprep.subr.bf16.mxu0 0
  %145 = vmatpush1.bf16.msra.mxu0 0
  %146 = vmatprep.subr.bf16.mxu0 0
  %147 = vmatpush1.bf16.msra.mxu0 0
  %148 = vmatprep.subr.bf16.mxu0 0
  %149 = vmatpush1.bf16.msra.mxu0 0
  %150 = vmatprep.subr.bf16.mxu0 0
  %151 = vmatpush1.bf16.msra.mxu0 0
  %152 = vmatprep.subr.bf16.mxu0 0
  %153 = vmatpush1.bf16.msra.mxu0 0
  %154 = vmatprep.subr.bf16.mxu0 0
  %155 = vmatpush1.bf16.msra.mxu0 0
  %156 = vmatprep.mubr.bf16.mxu0 0
  %157 = vmatmul.mubr.bf16.gmra.mrb[0].mxu0 %v97
  %v158 = vpop.f32.mrb[0].mxu0
  %v159 = vadd.f32 0.0, %v158
  %v160 = vpop.f32.mrb[0].mxu0
  %v161 = vpop.f32.mrb[0].mxu0
  %v162 = vadd.f32 0.0, %v161
  %v163 = vpop.f32.mrb[0].mxu0
  %164 = vmatprep.mubr.bf16.mxu0 0
  %165 = vmatmul.mubr.bf16.gmra.mrb[0].mxu0 %v100
  %v166 = vpop.f32.mrb[0].mxu0
  %v167 = vadd.f32 0.0, %v166
  %v168 = vpop.f32.mrb[0].mxu0
  %v169 = vpop.f32.mrb[0].mxu0
  %v170 = vadd.f32 0.0, %v169
  %v171 = vpop.f32.mrb[0].mxu0
  %172 = vmatprep.mubr.bf16.mxu0 0
  %173 = vmatmul.mubr.bf16.gmra.mrb[0].mxu0 %v103
  %v174 = vpop.f32.mrb[0].mxu0
  %v175 = vadd.f32 0.0, %v174
  %v176 = vpop.f32.mrb[0].mxu0
  %v177 = vpop.f32.mrb[0].mxu0
  %v178 = vadd.f32 0.0, %v177
  %v179 = vpop.f32.mrb[0].mxu0
  %180 = vmatprep.mubr.bf16.mxu0 0
  %181 = vmatmul.mubr.bf16.gmra.mrb[0].mxu0 %v106
  %v182 = vpop.f32.mrb[0].mxu0
  %v183 = vadd.f32 0.0, %v182
  %v184 = vpop.f32.mrb[0].mxu0
  %v185 = vpop.f32.mrb[0].mxu0
  %v186 = vadd.f32 0.0, %v185
  %v187 = vpop.f32.mrb[0].mxu0
  %188 = vmatprep.mubr.bf16.mxu0 0
  %189 = vmatmul.mubr.bf16.gmra.mrb[0].mxu0 %v109
  %v190 = vpop.f32.mrb[0].mxu0
  %v191 = vadd.f32 0.0, %v190
  %v192 = vpop.f32.mrb[0].mxu0
  %v193 = vpop.f32.mrb[0].mxu0
  %v194 = vadd.f32 0.0, %v193
  %v195 = vpop.f32.mrb[0].mxu0
  %196 = vmatprep.mubr.bf16.mxu0 0
  %197 = vmatmul.mubr.bf16.gmra.mrb[0].mxu0 %v112
  %v198 = vpop.f32.mrb[0].mxu0
  %v199 = vadd.f32 0.0, %v198
  %v200 = vpop.f32.mrb[0].mxu0
  %v201 = vpop.f32.mrb[0].mxu0
  %v202 = vadd.f32 0.0, %v201
  %v203 = vpop.f32.mrb[0].mxu0
  %204 = vmatprep.mubr.bf16.mxu0 0
  %205 = vmatmul.mubr.bf16.gmra.mrb[0].mxu0 %v115
  %v206 = vpop.f32.mrb[0].mxu0
  %v207 = vadd.f32 0.0, %v206
  %v208 = vpop.f32.mrb[0].mxu0
  %v209 = vpop.f32.mrb[0].mxu0
  %v210 = vadd.f32 0.0, %v209
  %v211 = vpop.f32.mrb[0].mxu0
  %212 = vmatprep.mubr.bf16.mxu0 0
  %213 = vmatmul.mubr.bf16.gmra.mrb[0].mxu0 %v118
  %v214 = vpop.f32.mrb[0].mxu0
  %v215 = vadd.f32 0.0, %v214
  %v216 = vpop.f32.mrb[0].mxu0
  %v217 = vpop.f32.mrb[0].mxu0
  %v218 = vadd.f32 0.0, %v217
  %v219 = vpop.f32.mrb[0].mxu0
  %220 = vdwg.mxu0
  %v221 = vld [vmem:[%s4] sm:$0x1]
  %v222 = vlaneseq
  %v223 = vshrl.u32 %v222, 7
  %v224 = vsub.s32 0, %v223
  %v225 = vrot.slane %v221, %v224
  %v226 = vmul.f32 %v159, %v225
  %v227 = vmul.f32 %v162, %v225
  %v228 = vmul.f32 %v167, %v225
  %v229 = vmul.f32 %v170, %v225
  %v230 = vmul.f32 %v175, %v225
  %v231 = vmul.f32 %v178, %v225
  %v232 = vmul.f32 %v183, %v225
  %v233 = vmul.f32 %v186, %v225
  %v234 = vmul.f32 %v191, %v225
  %v235 = vmul.f32 %v194, %v225
  %v236 = vmul.f32 %v199, %v225
  %v237 = vmul.f32 %v202, %v225
  %v238 = vmul.f32 %v207, %v225
  %v239 = vmul.f32 %v210, %v225
  %v240 = vmul.f32 %v215, %v225
  %v241 = vmul.f32 %v218, %v225
  %v242 = vld [vmem:[%s4 + $0x1] sm:$0x1]
  %v243 = vlaneseq
  %v244 = vshrl.u32 %v243, 7
  %v245 = vsub.s32 0, %v244
  %v246 = vrot.slane %v242, %v245
  %v247 = vadd.f32 %v226, %v246
  %v248 = vadd.f32 %v227, %v246
  %v249 = vadd.f32 %v228, %v246
  %v250 = vadd.f32 %v229, %v246
  %v251 = vadd.f32 %v230, %v246
  %v252 = vadd.f32 %v231, %v246
  %v253 = vadd.f32 %v232, %v246
  %v254 = vadd.f32 %v233, %v246
  %v255 = vadd.f32 %v234, %v246
  %v256 = vadd.f32 %v235, %v246
  %v257 = vadd.f32 %v236, %v246
  %v258 = vadd.f32 %v237, %v246
  %v259 = vadd.f32 %v238, %v246
  %v260 = vadd.f32 %v239, %v246
  %v261 = vadd.f32 %v240, %v246
  %v262 = vadd.f32 %v241, %v246
  %v263 = vmax.f32 %v247, 0.0
  %v264 = vmax.f32 %v248, 0.0
  %v265 = vmax.f32 %v249, 0.0
  %v266 = vmax.f32 %v250, 0.0
  %v267 = vmax.f32 %v251, 0.0
  %v268 = vmax.f32 %v252, 0.0
  %v269 = vmax.f32 %v253, 0.0
  %v270 = vmax.f32 %v254, 0.0
  %v271 = vmax.f32 %v255, 0.0
  %v272 = vmax.f32 %v256, 0.0
  %v273 = vmax.f32 %v257, 0.0
  %v274 = vmax.f32 %v258, 0.0
  %v275 = vmax.f32 %v259, 0.0
  %v276 = vmax.f32 %v260, 0.0
  %v277 = vmax.f32 %v261, 0.0
  %v278 = vmax.f32 %v262, 0.0
  %v279 = vld [vmem:[%s5] sm:$0xff]
  %v280 = vld [vmem:[%s5 + $0x8] sm:$0xff]
  %v281 = vld [vmem:[%s5 + $0x10] sm:$0xff]
  %v282 = vld [vmem:[%s5 + $0x18] sm:$0xff]
  %vm283 = vcmask 261120
  %v285 = vsel %vm283, %v263, 0
  %v288 = vsel %vm283, %v264, 0
  %v291 = vsel %vm283, %v265, 0
  %v294 = vsel %vm283, %v266, 0
  %v297 = vsel %vm283, %v267, 0
  %v300 = vsel %vm283, %v268, 0
  %v303 = vsel %vm283, %v269, 0
  %v306 = vsel %vm283, %v270, 0
  %v309 = vsel %vm283, %v271, 0
  %v312 = vsel %vm283, %v272, 0
  %v315 = vsel %vm283, %v273, 0
  %v318 = vsel %vm283, %v274, 0
  %v321 = vsel %vm283, %v275, 0
  %v324 = vsel %vm283, %v276, 0
  %v327 = vsel %vm283, %v277, 0
  %v330 = vsel %vm283, %v278, 0
  %332 = vmatprep.subr.mxu0 0.0
  %333 = vmatpush1.msra.mxu0 %v279
  %334 = vmatprep.subr.mxu0 0.0
  %335 = vmatpush1.msra.mxu0 %v280
  %336 = vmatprep.subr.mxu0 0.0
  %337 = vmatpush1.msra.mxu0 %v281
  %338 = vmatprep.subr.mxu0 0.0
  %339 = vmatpush1.msra.mxu0 %v282
  %340 = vmatprep.subr.mxu0 0.0
  %341 = vmatpush1.msra.mxu0 0.0
  %342 = vmatprep.subr.mxu0 0.0
  %343 = vmatpush1.msra.mxu0 0.0
  %344 = vmatprep.subr.mxu0 0.0
  %345 = vmatpush1.msra.mxu0 0.0
  %346 = vmatprep.subr.mxu0 0.0
  %347 = vmatpush1.msra.mxu0 0.0
  %348 = vmatprep.subr.mxu0 0.0
  %349 = vmatpush1.msra.mxu0 0.0
  %350 = vmatprep.subr.mxu0 0.0
  %351 = vmatpush1.msra.mxu0 0.0
  %352 = vmatprep.subr.mxu0 0.0
  %353 = vmatpush1.msra.mxu0 0.0
  %354 = vmatprep.subr.mxu0 0.0
  %355 = vmatpush1.msra.mxu0 0.0
  %356 = vmatprep.subr.mxu0 0.0
  %357 = vmatpush1.msra.mxu0 0.0
  %358 = vmatprep.subr.mxu0 0.0
  %359 = vmatpush1.msra.mxu0 0.0
  %360 = vmatprep.subr.mxu0 0.0
  %361 = vmatpush1.msra.mxu0 0.0
  %362 = vmatprep.subr.mxu0 0.0
  %363 = vmatpush1.msra.mxu0 0.0
  %364 = vmatprep.subr.mxu0 0.0
  %365 = vmatpush1.msra.mxu0 0.0
  %366 = vmatprep.subr.mxu0 0.0
  %367 = vmatpush1.msra.mxu0 0.0
  %368 = vmatprep.subr.mxu0 0.0
  %369 = vmatpush1.msra.mxu0 0.0
  %370 = vmatprep.subr.mxu0 0.0
  %371 = vmatpush1.msra.mxu0 0.0
  %372 = vmatprep.subr.mxu0 0.0
  %373 = vmatpush1.msra.mxu0 0.0
  %374 = vmatprep.subr.mxu0 0.0
  %375 = vmatpush1.msra.mxu0 0.0
  %376 = vmatprep.subr.mxu0 0.0
  %377 = vmatpush1.msra.mxu0 0.0
  %378 = vmatprep.subr.mxu0 0.0
  %379 = vmatpush1.msra.mxu0 0.0
  %380 = vmatprep.subr.mxu0 0.0
  %381 = vmatpush1.msra.mxu0 0.0
  %382 = vmatprep.subr.mxu0 0.0
  %383 = vmatpush1.msra.mxu0 0.0
  %384 = vmatprep.subr.mxu0 0.0
  %385 = vmatpush1.msra.mxu0 0.0
  %386 = vmatprep.subr.mxu0 0.0
  %387 = vmatpush1.msra.mxu0 0.0
  %388 = vmatprep.subr.mxu0 0.0
  %389 = vmatpush1.msra.mxu0 0.0
  %390 = vmatprep.subr.mxu0 0.0
  %391 = vmatpush1.msra.mxu0 0.0
  %392 = vmatprep.subr.mxu0 0.0
  %393 = vmatpush1.msra.mxu0 0.0
  %394 = vmatprep.subr.mxu0 0.0
  %395 = vmatpush1.msra.mxu0 0.0
  %396 = vmatprep.mubr.f32.mxu0 0.0
  %397 = vmatmul.mubr.f32.gmra.mrb[0].mxu0 %v285
  %v398 = vpop.f32.mrb[0].mxu0
  %v399 = vadd.f32 0.0, %v398
  %v400 = vpop.f32.mrb[0].mxu0
  %401 = vmatprep.mubr.f32.mxu0 0.0
  %402 = vmatmul.mubr.f32.gmra.mrb[0].mxu0 %v288
  %v403 = vpop.f32.mrb[0].mxu0
  %v404 = vadd.f32 0.0, %v403
  %v405 = vpop.f32.mrb[0].mxu0
  %406 = vmatprep.mubr.f32.mxu0 0.0
  %407 = vmatmul.mubr.f32.gmra.mrb[0].mxu0 %v291
  %v408 = vpop.f32.mrb[0].mxu0
  %v409 = vadd.f32 0.0, %v408
  %v410 = vpop.f32.mrb[0].mxu0
  %411 = vmatprep.mubr.f32.mxu0 0.0
  %412 = vmatmul.mubr.f32.gmra.mrb[0].mxu0 %v294
  %v413 = vpop.f32.mrb[0].mxu0
  %v414 = vadd.f32 0.0, %v413
  %v415 = vpop.f32.mrb[0].mxu0
  %416 = vmatprep.mubr.f32.mxu0 0.0
  %417 = vmatmul.mubr.f32.gmra.mrb[0].mxu0 %v297
  %v418 = vpop.f32.mrb[0].mxu0
  %v419 = vadd.f32 0.0, %v418
  %v420 = vpop.f32.mrb[0].mxu0
  %421 = vmatprep.mubr.f32.mxu0 0.0
  %422 = vmatmul.mubr.f32.gmra.mrb[0].mxu0 %v300
  %v423 = vpop.f32.mrb[0].mxu0
  %v424 = vadd.f32 0.0, %v423
  %v425 = vpop.f32.mrb[0].mxu0
  %426 = vmatprep.mubr.f32.mxu0 0.0
  %427 = vmatmul.mubr.f32.gmra.mrb[0].mxu0 %v303
  %v428 = vpop.f32.mrb[0].mxu0
  %v429 = vadd.f32 0.0, %v428
  %v430 = vpop.f32.mrb[0].mxu0
  %431 = vmatprep.mubr.f32.mxu0 0.0
  %432 = vmatmul.mubr.f32.gmra.mrb[0].mxu0 %v306
  %v433 = vpop.f32.mrb[0].mxu0
  %v434 = vadd.f32 0.0, %v433
  %v435 = vpop.f32.mrb[0].mxu0
  %436 = vmatprep.mubr.f32.mxu0 0.0
  %437 = vmatmul.mubr.f32.gmra.mrb[0].mxu0 %v309
  %v438 = vpop.f32.mrb[0].mxu0
  %v439 = vadd.f32 0.0, %v438
  %v440 = vpop.f32.mrb[0].mxu0
  %441 = vmatprep.mubr.f32.mxu0 0.0
  %442 = vmatmul.mubr.f32.gmra.mrb[0].mxu0 %v312
  %v443 = vpop.f32.mrb[0].mxu0
  %v444 = vadd.f32 0.0, %v443
  %v445 = vpop.f32.mrb[0].mxu0
  %446 = vmatprep.mubr.f32.mxu0 0.0
  %447 = vmatmul.mubr.f32.gmra.mrb[0].mxu0 %v315
  %v448 = vpop.f32.mrb[0].mxu0
  %v449 = vadd.f32 0.0, %v448
  %v450 = vpop.f32.mrb[0].mxu0
  %451 = vmatprep.mubr.f32.mxu0 0.0
  %452 = vmatmul.mubr.f32.gmra.mrb[0].mxu0 %v318
  %v453 = vpop.f32.mrb[0].mxu0
  %v454 = vadd.f32 0.0, %v453
  %v455 = vpop.f32.mrb[0].mxu0
  %456 = vmatprep.mubr.f32.mxu0 0.0
  %457 = vmatmul.mubr.f32.gmra.mrb[0].mxu0 %v321
  %v458 = vpop.f32.mrb[0].mxu0
  %v459 = vadd.f32 0.0, %v458
  %v460 = vpop.f32.mrb[0].mxu0
  %461 = vmatprep.mubr.f32.mxu0 0.0
  %462 = vmatmul.mubr.f32.gmra.mrb[0].mxu0 %v324
  %v463 = vpop.f32.mrb[0].mxu0
  %v464 = vadd.f32 0.0, %v463
  %v465 = vpop.f32.mrb[0].mxu0
  %466 = vmatprep.mubr.f32.mxu0 0.0
  %467 = vmatmul.mubr.f32.gmra.mrb[0].mxu0 %v327
  %v468 = vpop.f32.mrb[0].mxu0
  %v469 = vadd.f32 0.0, %v468
  %v470 = vpop.f32.mrb[0].mxu0
  %471 = vmatprep.mubr.f32.mxu0 0.0
  %472 = vmatmul.mubr.f32.gmra.mrb[0].mxu0 %v330
  %v473 = vpop.f32.mrb[0].mxu0
  %v474 = vadd.f32 0.0, %v473
  %v475 = vpop.f32.mrb[0].mxu0
  %476 = vdwg.mxu0
  %v477 = vld [vmem:[%s6] sm:$0x1]
  %v478 = vlaneseq
  %v479 = vshrl.u32 %v478, 7
  %v480 = vsub.s32 0, %v479
  %v481 = vrot.slane %v477, %v480
  %v482 = vmul.f32 %v399, %v481
  %v483 = vmul.f32 %v404, %v481
  %v484 = vmul.f32 %v409, %v481
  %v485 = vmul.f32 %v414, %v481
  %v486 = vmul.f32 %v419, %v481
  %v487 = vmul.f32 %v424, %v481
  %v488 = vmul.f32 %v429, %v481
  %v489 = vmul.f32 %v434, %v481
  %v490 = vmul.f32 %v439, %v481
  %v491 = vmul.f32 %v444, %v481
  %v492 = vmul.f32 %v449, %v481
  %v493 = vmul.f32 %v454, %v481
  %v494 = vmul.f32 %v459, %v481
  %v495 = vmul.f32 %v464, %v481
  %v496 = vmul.f32 %v469, %v481
  %v497 = vmul.f32 %v474, %v481
  %v498 = vld [vmem:[%s6 + $0x1] sm:$0x1]
  %v499 = vlaneseq
  %v500 = vshrl.u32 %v499, 7
  %v501 = vsub.s32 0, %v500
  %v502 = vrot.slane %v498, %v501
  %v503 = vadd.f32 %v482, %v502
  %v504 = vadd.f32 %v483, %v502
  %v505 = vadd.f32 %v484, %v502
  %v506 = vadd.f32 %v485, %v502
  %v507 = vadd.f32 %v486, %v502
  %v508 = vadd.f32 %v487, %v502
  %v509 = vadd.f32 %v488, %v502
  %v510 = vadd.f32 %v489, %v502
  %v511 = vadd.f32 %v490, %v502
  %v512 = vadd.f32 %v491, %v502
  %v513 = vadd.f32 %v492, %v502
  %v514 = vadd.f32 %v493, %v502
  %v515 = vadd.f32 %v494, %v502
  %v516 = vadd.f32 %v495, %v502
  %v517 = vadd.f32 %v496, %v502
  %v518 = vadd.f32 %v497, %v502
  %v519 = vmax.f32 %v503, 0.0
  %v520 = vmax.f32 %v504, 0.0
  %v521 = vmax.f32 %v505, 0.0
  %v522 = vmax.f32 %v506, 0.0
  %v523 = vmax.f32 %v507, 0.0
  %v524 = vmax.f32 %v508, 0.0
  %v525 = vmax.f32 %v509, 0.0
  %v526 = vmax.f32 %v510, 0.0
  %v527 = vmax.f32 %v511, 0.0
  %v528 = vmax.f32 %v512, 0.0
  %v529 = vmax.f32 %v513, 0.0
  %v530 = vmax.f32 %v514, 0.0
  %v531 = vmax.f32 %v515, 0.0
  %v532 = vmax.f32 %v516, 0.0
  %v533 = vmax.f32 %v517, 0.0
  %v534 = vmax.f32 %v518, 0.0
  %v535 = vld [vmem:[%s1] sm:$0xff]
  %v536 = vlaneseq
  %v537 = vshrl.u32 %v536, 7
  %v538 = vsub.s32 0, %v537
  %v539 = vrot.slane %v535, %v538
  %541 = vbcast.lane.b32.xlu0 %v539, 256
  %v542 = vpop.permute.xlu0 %541
  %s544 = sor.u32 256, 8
  %545 = vbcast.lane.b32.xlu0 %v539, %s544
  %v546 = vpop.permute.xlu0 %545
  %v547 = vlaneseq
  %v548 = vshrl.u32 %v547, 7
  %v549 = vsub.s32 1, %v548
  %v550 = vrot.slane %v535, %v549
  %552 = vbcast.lane.b32.xlu0 %v550, 256
  %v553 = vpop.permute.xlu0 %552
  %s555 = sor.u32 256, 8
  %556 = vbcast.lane.b32.xlu0 %v550, %s555
  %v557 = vpop.permute.xlu0 %556
  %v558 = vlaneseq
  %v559 = vshrl.u32 %v558, 7
  %v560 = vsub.s32 2, %v559
  %v561 = vrot.slane %v535, %v560
  %563 = vbcast.lane.b32.xlu0 %v561, 256
  %v564 = vpop.permute.xlu0 %563
  %s566 = sor.u32 256, 8
  %567 = vbcast.lane.b32.xlu0 %v561, %s566
  %v568 = vpop.permute.xlu0 %567
  %v569 = vlaneseq
  %v570 = vshrl.u32 %v569, 7
  %v571 = vsub.s32 3, %v570
  %v572 = vrot.slane %v535, %v571
  %574 = vbcast.lane.b32.xlu0 %v572, 256
  %v575 = vpop.permute.xlu0 %574
  %s577 = sor.u32 256, 8
  %578 = vbcast.lane.b32.xlu0 %v572, %s577
  %v579 = vpop.permute.xlu0 %578
  %v580 = vlaneseq
  %v581 = vshrl.u32 %v580, 7
  %v582 = vsub.s32 4, %v581
  %v583 = vrot.slane %v535, %v582
  %585 = vbcast.lane.b32.xlu0 %v583, 256
  %v586 = vpop.permute.xlu0 %585
  %s588 = sor.u32 256, 8
  %589 = vbcast.lane.b32.xlu0 %v583, %s588
  %v590 = vpop.permute.xlu0 %589
  %v591 = vlaneseq
  %v592 = vshrl.u32 %v591, 7
  %v593 = vsub.s32 5, %v592
  %v594 = vrot.slane %v535, %v593
  %596 = vbcast.lane.b32.xlu0 %v594, 256
  %v597 = vpop.permute.xlu0 %596
  %s599 = sor.u32 256, 8
  %600 = vbcast.lane.b32.xlu0 %v594, %s599
  %v601 = vpop.permute.xlu0 %600
  %v602 = vlaneseq
  %v603 = vshrl.u32 %v602, 7
  %v604 = vsub.s32 6, %v603
  %v605 = vrot.slane %v535, %v604
  %607 = vbcast.lane.b32.xlu0 %v605, 256
  %v608 = vpop.permute.xlu0 %607
  %s610 = sor.u32 256, 8
  %611 = vbcast.lane.b32.xlu0 %v605, %s610
  %v612 = vpop.permute.xlu0 %611
  %v613 = vlaneseq
  %v614 = vshrl.u32 %v613, 7
  %v615 = vsub.s32 7, %v614
  %v616 = vrot.slane %v535, %v615
  %618 = vbcast.lane.b32.xlu0 %v616, 256
  %v619 = vpop.permute.xlu0 %618
  %s621 = sor.u32 256, 8
  %622 = vbcast.lane.b32.xlu0 %v616, %s621
  %v623 = vpop.permute.xlu0 %622
  %v624 = vmul.f32 %v519, %v542
  %v625 = vmul.f32 %v520, %v546
  %v626 = vmul.f32 %v521, %v553
  %v627 = vmul.f32 %v522, %v557
  %v628 = vmul.f32 %v523, %v564
  %v629 = vmul.f32 %v524, %v568
  %v630 = vmul.f32 %v525, %v575
  %v631 = vmul.f32 %v526, %v579
  %v632 = vmul.f32 %v527, %v586
  %v633 = vmul.f32 %v528, %v590
  %v634 = vmul.f32 %v529, %v597
  %v635 = vmul.f32 %v530, %v601
  %v636 = vmul.f32 %v531, %v608
  %v637 = vmul.f32 %v532, %v612
  %v638 = vmul.f32 %v533, %v619
  %v639 = vmul.f32 %v534, %v623
  %vm640 = vcmask 130048
  %v641 = vsel %vm640, %v535, 0.0
  %642 = vadd.xlane.f32.xlu0 %v641
  %v643 = vpop.xlane.xlu0 %642
  %v644 = vmax.f32 %v643, 1.0
  %vm645 = vcmask 523264
  %v646 = vsel %vm645, %v624, 0.0
  %v647 = vsel %vm645, %v625, 0.0
  %v648 = vadd.f32 %v646, %v647
  %v649 = vrot.slane %v648, 4
  %v650 = vadd.f32 %v648, %v649
  %v651 = vrot.slane %v650, 2
  %v652 = vadd.f32 %v650, %v651
  %v653 = vrot.slane %v652, 1
  %v654 = vadd.f32 %v652, %v653
  %v655 = vsel %vm645, %v626, 0.0
  %v656 = vsel %vm645, %v627, 0.0
  %v657 = vadd.f32 %v655, %v656
  %v658 = vrot.slane %v657, 4
  %v659 = vadd.f32 %v657, %v658
  %v660 = vrot.slane %v659, 2
  %v661 = vadd.f32 %v659, %v660
  %v662 = vrot.slane %v661, 1
  %v663 = vadd.f32 %v661, %v662
  %v664 = vsel %vm645, %v628, 0.0
  %v665 = vsel %vm645, %v629, 0.0
  %v666 = vadd.f32 %v664, %v665
  %v667 = vrot.slane %v666, 4
  %v668 = vadd.f32 %v666, %v667
  %v669 = vrot.slane %v668, 2
  %v670 = vadd.f32 %v668, %v669
  %v671 = vrot.slane %v670, 1
  %v672 = vadd.f32 %v670, %v671
  %v673 = vsel %vm645, %v630, 0.0
  %v674 = vsel %vm645, %v631, 0.0
  %v675 = vadd.f32 %v673, %v674
  %v676 = vrot.slane %v675, 4
  %v677 = vadd.f32 %v675, %v676
  %v678 = vrot.slane %v677, 2
  %v679 = vadd.f32 %v677, %v678
  %v680 = vrot.slane %v679, 1
  %v681 = vadd.f32 %v679, %v680
  %v682 = vsel %vm645, %v632, 0.0
  %v683 = vsel %vm645, %v633, 0.0
  %v684 = vadd.f32 %v682, %v683
  %v685 = vrot.slane %v684, 4
  %v686 = vadd.f32 %v684, %v685
  %v687 = vrot.slane %v686, 2
  %v688 = vadd.f32 %v686, %v687
  %v689 = vrot.slane %v688, 1
  %v690 = vadd.f32 %v688, %v689
  %v691 = vsel %vm645, %v634, 0.0
  %v692 = vsel %vm645, %v635, 0.0
  %v693 = vadd.f32 %v691, %v692
  %v694 = vrot.slane %v693, 4
  %v695 = vadd.f32 %v693, %v694
  %v696 = vrot.slane %v695, 2
  %v697 = vadd.f32 %v695, %v696
  %v698 = vrot.slane %v697, 1
  %v699 = vadd.f32 %v697, %v698
  %v700 = vsel %vm645, %v636, 0.0
  %v701 = vsel %vm645, %v637, 0.0
  %v702 = vadd.f32 %v700, %v701
  %v703 = vrot.slane %v702, 4
  %v704 = vadd.f32 %v702, %v703
  %v705 = vrot.slane %v704, 2
  %v706 = vadd.f32 %v704, %v705
  %v707 = vrot.slane %v706, 1
  %v708 = vadd.f32 %v706, %v707
  %v709 = vsel %vm645, %v638, 0.0
  %v710 = vsel %vm645, %v639, 0.0
  %v711 = vadd.f32 %v709, %v710
  %v712 = vrot.slane %v711, 4
  %v713 = vadd.f32 %v711, %v712
  %v714 = vrot.slane %v713, 2
  %v715 = vadd.f32 %v713, %v714
  %v716 = vrot.slane %v715, 1
  %v717 = vadd.f32 %v715, %v716
  %v719 = vrot.slane %v644, 1
  %v720 = vrot.slane %v644, 2
  %v721 = vrot.slane %v644, 3
  %v722 = vrot.slane %v644, 4
  %v723 = vrot.slane %v644, 5
  %v724 = vrot.slane %v644, 6
  %v725 = vrot.slane %v644, 7
  %v734 = vrcp.pop %v644
  %v735 = vmul.f32 %v654, %v734
  %v736 = vrcp.pop %v719
  %v737 = vmul.f32 %v663, %v736
  %v738 = vrcp.pop %v720
  %v739 = vmul.f32 %v672, %v738
  %v740 = vrcp.pop %v721
  %v741 = vmul.f32 %v681, %v740
  %v742 = vrcp.pop %v722
  %v743 = vmul.f32 %v690, %v742
  %v744 = vrcp.pop %v723
  %v745 = vmul.f32 %v699, %v744
  %v746 = vrcp.pop %v724
  %v747 = vmul.f32 %v708, %v746
  %v748 = vrcp.pop %v725
  %v749 = vmul.f32 %v717, %v748
  %v750 = vmul.f32 %v624, %v519
  %v751 = vmul.f32 %v625, %v520
  %v752 = vmul.f32 %v626, %v521
  %v753 = vmul.f32 %v627, %v522
  %v754 = vmul.f32 %v628, %v523
  %v755 = vmul.f32 %v629, %v524
  %v756 = vmul.f32 %v630, %v525
  %v757 = vmul.f32 %v631, %v526
  %v758 = vmul.f32 %v632, %v527
  %v759 = vmul.f32 %v633, %v528
  %v760 = vmul.f32 %v634, %v529
  %v761 = vmul.f32 %v635, %v530
  %v762 = vmul.f32 %v636, %v531
  %v763 = vmul.f32 %v637, %v532
  %v764 = vmul.f32 %v638, %v533
  %v765 = vmul.f32 %v639, %v534
  %v766 = vsel %vm645, %v750, 0.0
  %v767 = vsel %vm645, %v751, 0.0
  %v768 = vadd.f32 %v766, %v767
  %v769 = vrot.slane %v768, 4
  %v770 = vadd.f32 %v768, %v769
  %v771 = vrot.slane %v770, 2
  %v772 = vadd.f32 %v770, %v771
  %v773 = vrot.slane %v772, 1
  %v774 = vadd.f32 %v772, %v773
  %v775 = vsel %vm645, %v752, 0.0
  %v776 = vsel %vm645, %v753, 0.0
  %v777 = vadd.f32 %v775, %v776
  %v778 = vrot.slane %v777, 4
  %v779 = vadd.f32 %v777, %v778
  %v780 = vrot.slane %v779, 2
  %v781 = vadd.f32 %v779, %v780
  %v782 = vrot.slane %v781, 1
  %v783 = vadd.f32 %v781, %v782
  %v784 = vsel %vm645, %v754, 0.0
  %v785 = vsel %vm645, %v755, 0.0
  %v786 = vadd.f32 %v784, %v785
  %v787 = vrot.slane %v786, 4
  %v788 = vadd.f32 %v786, %v787
  %v789 = vrot.slane %v788, 2
  %v790 = vadd.f32 %v788, %v789
  %v791 = vrot.slane %v790, 1
  %v792 = vadd.f32 %v790, %v791
  %v793 = vsel %vm645, %v756, 0.0
  %v794 = vsel %vm645, %v757, 0.0
  %v795 = vadd.f32 %v793, %v794
  %v796 = vrot.slane %v795, 4
  %v797 = vadd.f32 %v795, %v796
  %v798 = vrot.slane %v797, 2
  %v799 = vadd.f32 %v797, %v798
  %v800 = vrot.slane %v799, 1
  %v801 = vadd.f32 %v799, %v800
  %v802 = vsel %vm645, %v758, 0.0
  %v803 = vsel %vm645, %v759, 0.0
  %v804 = vadd.f32 %v802, %v803
  %v805 = vrot.slane %v804, 4
  %v806 = vadd.f32 %v804, %v805
  %v807 = vrot.slane %v806, 2
  %v808 = vadd.f32 %v806, %v807
  %v809 = vrot.slane %v808, 1
  %v810 = vadd.f32 %v808, %v809
  %v811 = vsel %vm645, %v760, 0.0
  %v812 = vsel %vm645, %v761, 0.0
  %v813 = vadd.f32 %v811, %v812
  %v814 = vrot.slane %v813, 4
  %v815 = vadd.f32 %v813, %v814
  %v816 = vrot.slane %v815, 2
  %v817 = vadd.f32 %v815, %v816
  %v818 = vrot.slane %v817, 1
  %v819 = vadd.f32 %v817, %v818
  %v820 = vsel %vm645, %v762, 0.0
  %v821 = vsel %vm645, %v763, 0.0
  %v822 = vadd.f32 %v820, %v821
  %v823 = vrot.slane %v822, 4
  %v824 = vadd.f32 %v822, %v823
  %v825 = vrot.slane %v824, 2
  %v826 = vadd.f32 %v824, %v825
  %v827 = vrot.slane %v826, 1
  %v828 = vadd.f32 %v826, %v827
  %v829 = vsel %vm645, %v764, 0.0
  %v830 = vsel %vm645, %v765, 0.0
  %v831 = vadd.f32 %v829, %v830
  %v832 = vrot.slane %v831, 4
  %v833 = vadd.f32 %v831, %v832
  %v834 = vrot.slane %v833, 2
  %v835 = vadd.f32 %v833, %v834
  %v836 = vrot.slane %v835, 1
  %v837 = vadd.f32 %v835, %v836
  %v846 = vrot.slane %v737, 7
  %vm847 = vcmask 1041409
  %v848 = vsel %vm847, %v846, %v735
  %v849 = vrot.slane %v739, 6
  %vm850 = vcmask 1042434
  %v851 = vsel %vm850, %v849, %v848
  %v852 = vrot.slane %v741, 5
  %vm853 = vcmask 1043459
  %v854 = vsel %vm853, %v852, %v851
  %v855 = vrot.slane %v743, 4
  %vm856 = vcmask 1044484
  %v857 = vsel %vm856, %v855, %v854
  %v858 = vrot.slane %v745, 3
  %vm859 = vcmask 1045509
  %v860 = vsel %vm859, %v858, %v857
  %v861 = vrot.slane %v747, 2
  %vm862 = vcmask 1046534
  %v863 = vsel %vm862, %v861, %v860
  %v864 = vrot.slane %v749, 1
  %vm865 = vcmask 1047559
  %v866 = vsel %vm865, %v864, %v863
  %v868 = vmul.f32 %v643, %v866
  %v869 = vmul.f32 %v868, %v866
  %v871 = vrot.slane %v869, 1
  %v872 = vrot.slane %v869, 2
  %v873 = vrot.slane %v869, 3
  %v874 = vrot.slane %v869, 4
  %v875 = vrot.slane %v869, 5
  %v876 = vrot.slane %v869, 6
  %v877 = vrot.slane %v869, 7
  %v886 = vsub.f32 %v774, %v869
  %v887 = vsub.f32 %v783, %v871
  %v888 = vsub.f32 %v792, %v872
  %v889 = vsub.f32 %v801, %v873
  %v890 = vsub.f32 %v810, %v874
  %v891 = vsub.f32 %v819, %v875
  %v892 = vsub.f32 %v828, %v876
  %v893 = vsub.f32 %v837, %v877
  %v894 = vmax.f32 %v886, 0.0
  %v895 = vmax.f32 %v887, 0.0
  %v896 = vmax.f32 %v888, 0.0
  %v897 = vmax.f32 %v889, 0.0
  %v898 = vmax.f32 %v890, 0.0
  %v899 = vmax.f32 %v891, 0.0
  %v900 = vmax.f32 %v892, 0.0
  %v901 = vmax.f32 %v893, 0.0
  %vm902 = vcmp.le.f32.partialorder %v643, 1.0
  %v903 = vsub.f32 %v643, 1.0
  %v904 = vsel %vm902, 1.0, %v903
  %v906 = vrot.slane %v904, 1
  %v907 = vrot.slane %v904, 2
  %v908 = vrot.slane %v904, 3
  %v909 = vrot.slane %v904, 4
  %v910 = vrot.slane %v904, 5
  %v911 = vrot.slane %v904, 6
  %v912 = vrot.slane %v904, 7
  %v921 = vrcp.pop %v904
  %v922 = vmul.f32 %v894, %v921
  %v923 = vrcp.pop %v906
  %v924 = vmul.f32 %v895, %v923
  %v925 = vrcp.pop %v907
  %v926 = vmul.f32 %v896, %v925
  %v927 = vrcp.pop %v908
  %v928 = vmul.f32 %v897, %v927
  %v929 = vrcp.pop %v909
  %v930 = vmul.f32 %v898, %v929
  %v931 = vrcp.pop %v910
  %v932 = vmul.f32 %v899, %v931
  %v933 = vrcp.pop %v911
  %v934 = vmul.f32 %v900, %v933
  %v935 = vrcp.pop %v912
  %v936 = vmul.f32 %v901, %v935
  %v937 = vadd.f32 %v922, 1e-31
  %v938 = vadd.f32 %v924, 1e-31
  %v939 = vadd.f32 %v926, 1e-31
  %v940 = vadd.f32 %v928, 1e-31
  %v941 = vadd.f32 %v930, 1e-31
  %v942 = vadd.f32 %v932, 1e-31
  %v943 = vadd.f32 %v934, 1e-31
  %v944 = vadd.f32 %v936, 1e-31
  %v945 = vrsqrt.pop %v937
  %v946 = vmul.f32 %v937, %v945
  %vm947 = vcmp.eq.f32.partialorder %v937, inf
  %v948 = vsel %vm947, %v937, %v946
  %vm949 = vcmp.eq.f32.partialorder %v937, 0.0
  %v950 = vand.u32 %v937, 2147483648
  %v951 = vsel %vm949, %v950, %v948
  %v952 = vrsqrt.pop %v938
  %v953 = vmul.f32 %v938, %v952
  %vm954 = vcmp.eq.f32.partialorder %v938, inf
  %v955 = vsel %vm954, %v938, %v953
  %vm956 = vcmp.eq.f32.partialorder %v938, 0.0
  %v957 = vand.u32 %v938, 2147483648
  %v958 = vsel %vm956, %v957, %v955
  %v959 = vrsqrt.pop %v939
  %v960 = vmul.f32 %v939, %v959
  %vm961 = vcmp.eq.f32.partialorder %v939, inf
  %v962 = vsel %vm961, %v939, %v960
  %vm963 = vcmp.eq.f32.partialorder %v939, 0.0
  %v964 = vand.u32 %v939, 2147483648
  %v965 = vsel %vm963, %v964, %v962
  %v966 = vrsqrt.pop %v940
  %v967 = vmul.f32 %v940, %v966
  %vm968 = vcmp.eq.f32.partialorder %v940, inf
  %v969 = vsel %vm968, %v940, %v967
  %vm970 = vcmp.eq.f32.partialorder %v940, 0.0
  %v971 = vand.u32 %v940, 2147483648
  %v972 = vsel %vm970, %v971, %v969
  %v973 = vrsqrt.pop %v941
  %v974 = vmul.f32 %v941, %v973
  %vm975 = vcmp.eq.f32.partialorder %v941, inf
  %v976 = vsel %vm975, %v941, %v974
  %vm977 = vcmp.eq.f32.partialorder %v941, 0.0
  %v978 = vand.u32 %v941, 2147483648
  %v979 = vsel %vm977, %v978, %v976
  %v980 = vrsqrt.pop %v942
  %v981 = vmul.f32 %v942, %v980
  %vm982 = vcmp.eq.f32.partialorder %v942, inf
  %v983 = vsel %vm982, %v942, %v981
  %vm984 = vcmp.eq.f32.partialorder %v942, 0.0
  %v985 = vand.u32 %v942, 2147483648
  %v986 = vsel %vm984, %v985, %v983
  %v987 = vrsqrt.pop %v943
  %v988 = vmul.f32 %v943, %v987
  %vm989 = vcmp.eq.f32.partialorder %v943, inf
  %v990 = vsel %vm989, %v943, %v988
  %vm991 = vcmp.eq.f32.partialorder %v943, 0.0
  %v992 = vand.u32 %v943, 2147483648
  %v993 = vsel %vm991, %v992, %v990
  %v994 = vrsqrt.pop %v944
  %v995 = vmul.f32 %v944, %v994
  %vm996 = vcmp.eq.f32.partialorder %v944, inf
  %v997 = vsel %vm996, %v944, %v995
  %vm998 = vcmp.eq.f32.partialorder %v944, 0.0
  %v999 = vand.u32 %v944, 2147483648
  %v1000 = vsel %vm998, %v999, %v997
  %v1001 = vld [vmem:[%s7] sm:$0xff]
  %v1002 = vld [vmem:[%s7 + $0x8] sm:$0xff]
  %v1003 = vld [vmem:[%s7 + $0x10] sm:$0xff]
  %v1004 = vld [vmem:[%s7 + $0x18] sm:$0xff]
  %v1005 = vld [vmem:[%s7 + $0x20] sm:$0xff]
  %v1006 = vld [vmem:[%s7 + $0x28] sm:$0xff]
  %v1007 = vld [vmem:[%s7 + $0x30] sm:$0xff]
  %v1008 = vld [vmem:[%s7 + $0x38] sm:$0xff]
  %v1009 = vld [vmem:[%s7 + $0x40] sm:$0xff]
  %v1010 = vld [vmem:[%s7 + $0x48] sm:$0xff]
  %v1011 = vld [vmem:[%s7 + $0x50] sm:$0xff]
  %v1012 = vld [vmem:[%s7 + $0x58] sm:$0xff]
  %v1013 = vld [vmem:[%s7 + $0x60] sm:$0xff]
  %v1014 = vld [vmem:[%s7 + $0x68] sm:$0xff]
  %v1015 = vld [vmem:[%s7 + $0x70] sm:$0xff]
  %v1016 = vld [vmem:[%s7 + $0x78] sm:$0xff]
  %v1017 = vld [vmem:[%s7 + $0x80] sm:$0xf]
  %v1018 = vld [vmem:[%s2] sm:$0xff]
  %v1027 = vrot.slane %v958, 7
  %v1028 = vsel %vm847, %v1027, %v951
  %v1029 = vrot.slane %v965, 6
  %v1030 = vsel %vm850, %v1029, %v1028
  %v1031 = vrot.slane %v972, 5
  %v1032 = vsel %vm853, %v1031, %v1030
  %v1033 = vrot.slane %v979, 4
  %v1034 = vsel %vm856, %v1033, %v1032
  %v1035 = vrot.slane %v986, 3
  %v1036 = vsel %vm859, %v1035, %v1034
  %v1037 = vrot.slane %v993, 2
  %v1038 = vsel %vm862, %v1037, %v1036
  %v1039 = vrot.slane %v1000, 1
  %v1040 = vsel %vm865, %v1039, %v1038
  %v1041 = vsel %vm645, %v1040, 0
  %1043 = vmatprep.subr.mxu0 0.0
  %1044 = vmatpush1.msra.mxu0 %v1009
  %1045 = vmatprep.subr.mxu0 0.0
  %1046 = vmatpush1.msra.mxu0 %v1010
  %1047 = vmatprep.subr.mxu0 0.0
  %1048 = vmatpush1.msra.mxu0 %v1011
  %1049 = vmatprep.subr.mxu0 0.0
  %1050 = vmatpush1.msra.mxu0 %v1012
  %1051 = vmatprep.subr.mxu0 0.0
  %1052 = vmatpush1.msra.mxu0 %v1013
  %1053 = vmatprep.subr.mxu0 0.0
  %1054 = vmatpush1.msra.mxu0 %v1014
  %1055 = vmatprep.subr.mxu0 0.0
  %1056 = vmatpush1.msra.mxu0 %v1015
  %1057 = vmatprep.subr.mxu0 0.0
  %1058 = vmatpush1.msra.mxu0 %v1016
  %1059 = vmatprep.subr.mxu0 0.0
  %1060 = vmatpush1.msra.mxu0 0.0
  %1061 = vmatprep.subr.mxu0 0.0
  %1062 = vmatpush1.msra.mxu0 0.0
  %1063 = vmatprep.subr.mxu0 0.0
  %1064 = vmatpush1.msra.mxu0 0.0
  %1065 = vmatprep.subr.mxu0 0.0
  %1066 = vmatpush1.msra.mxu0 0.0
  %1067 = vmatprep.subr.mxu0 0.0
  %1068 = vmatpush1.msra.mxu0 0.0
  %1069 = vmatprep.subr.mxu0 0.0
  %1070 = vmatpush1.msra.mxu0 0.0
  %1071 = vmatprep.subr.mxu0 0.0
  %1072 = vmatpush1.msra.mxu0 0.0
  %1073 = vmatprep.subr.mxu0 0.0
  %1074 = vmatpush1.msra.mxu0 0.0
  %1075 = vmatprep.subr.mxu0 0.0
  %1076 = vmatpush1.msra.mxu0 0.0
  %1077 = vmatprep.subr.mxu0 0.0
  %1078 = vmatpush1.msra.mxu0 0.0
  %1079 = vmatprep.subr.mxu0 0.0
  %1080 = vmatpush1.msra.mxu0 0.0
  %1081 = vmatprep.subr.mxu0 0.0
  %1082 = vmatpush1.msra.mxu0 0.0
  %1083 = vmatprep.subr.mxu0 0.0
  %1084 = vmatpush1.msra.mxu0 0.0
  %1085 = vmatprep.subr.mxu0 0.0
  %1086 = vmatpush1.msra.mxu0 0.0
  %1087 = vmatprep.subr.mxu0 0.0
  %1088 = vmatpush1.msra.mxu0 0.0
  %1089 = vmatprep.subr.mxu0 0.0
  %1090 = vmatpush1.msra.mxu0 0.0
  %1091 = vmatprep.subr.mxu0 0.0
  %1092 = vmatpush1.msra.mxu0 0.0
  %1093 = vmatprep.subr.mxu0 0.0
  %1094 = vmatpush1.msra.mxu0 0.0
  %1095 = vmatprep.subr.mxu0 0.0
  %1096 = vmatpush1.msra.mxu0 0.0
  %1097 = vmatprep.subr.mxu0 0.0
  %1098 = vmatpush1.msra.mxu0 0.0
  %1099 = vmatprep.subr.mxu0 0.0
  %1100 = vmatpush1.msra.mxu0 0.0
  %1101 = vmatprep.subr.mxu0 0.0
  %1102 = vmatpush1.msra.mxu0 0.0
  %1103 = vmatprep.subr.mxu0 0.0
  %1104 = vmatpush1.msra.mxu0 0.0
  %1105 = vmatprep.subr.mxu0 0.0
  %1106 = vmatpush1.msra.mxu0 0.0
  %1107 = vmatprep.mubr.f32.mxu0 0.0
  %1108 = vmatmul.mubr.f32.gmra.mrb[0].mxu0 %v1041
  %v1109 = vpop.f32.mrb[0].mxu0
  %v1110 = vadd.f32 0.0, %v1109
  %v1111 = vpop.f32.mrb[0].mxu0
  %1112 = vdwg.mxu0
  %v1113 = vsel %vm645, %v866, 0
  %1115 = vmatprep.subr.mxu0 0.0
  %1116 = vmatpush1.msra.mxu0 %v1001
  %1117 = vmatprep.subr.mxu0 0.0
  %1118 = vmatpush1.msra.mxu0 %v1002
  %1119 = vmatprep.subr.mxu0 0.0
  %1120 = vmatpush1.msra.mxu0 %v1003
  %1121 = vmatprep.subr.mxu0 0.0
  %1122 = vmatpush1.msra.mxu0 %v1004
  %1123 = vmatprep.subr.mxu0 0.0
  %1124 = vmatpush1.msra.mxu0 %v1005
  %1125 = vmatprep.subr.mxu0 0.0
  %1126 = vmatpush1.msra.mxu0 %v1006
  %1127 = vmatprep.subr.mxu0 0.0
  %1128 = vmatpush1.msra.mxu0 %v1007
  %1129 = vmatprep.subr.mxu0 0.0
  %1130 = vmatpush1.msra.mxu0 %v1008
  %1131 = vmatprep.subr.mxu0 0.0
  %1132 = vmatpush1.msra.mxu0 0.0
  %1133 = vmatprep.subr.mxu0 0.0
  %1134 = vmatpush1.msra.mxu0 0.0
  %1135 = vmatprep.subr.mxu0 0.0
  %1136 = vmatpush1.msra.mxu0 0.0
  %1137 = vmatprep.subr.mxu0 0.0
  %1138 = vmatpush1.msra.mxu0 0.0
  %1139 = vmatprep.subr.mxu0 0.0
  %1140 = vmatpush1.msra.mxu0 0.0
  %1141 = vmatprep.subr.mxu0 0.0
  %1142 = vmatpush1.msra.mxu0 0.0
  %1143 = vmatprep.subr.mxu0 0.0
  %1144 = vmatpush1.msra.mxu0 0.0
  %1145 = vmatprep.subr.mxu0 0.0
  %1146 = vmatpush1.msra.mxu0 0.0
  %1147 = vmatprep.subr.mxu0 0.0
  %1148 = vmatpush1.msra.mxu0 0.0
  %1149 = vmatprep.subr.mxu0 0.0
  %1150 = vmatpush1.msra.mxu0 0.0
  %1151 = vmatprep.subr.mxu0 0.0
  %1152 = vmatpush1.msra.mxu0 0.0
  %1153 = vmatprep.subr.mxu0 0.0
  %1154 = vmatpush1.msra.mxu0 0.0
  %1155 = vmatprep.subr.mxu0 0.0
  %1156 = vmatpush1.msra.mxu0 0.0
  %1157 = vmatprep.subr.mxu0 0.0
  %1158 = vmatpush1.msra.mxu0 0.0
  %1159 = vmatprep.subr.mxu0 0.0
  %1160 = vmatpush1.msra.mxu0 0.0
  %1161 = vmatprep.subr.mxu0 0.0
  %1162 = vmatpush1.msra.mxu0 0.0
  %1163 = vmatprep.subr.mxu0 0.0
  %1164 = vmatpush1.msra.mxu0 0.0
  %1165 = vmatprep.subr.mxu0 0.0
  %1166 = vmatpush1.msra.mxu0 0.0
  %1167 = vmatprep.subr.mxu0 0.0
  %1168 = vmatpush1.msra.mxu0 0.0
  %1169 = vmatprep.subr.mxu0 0.0
  %1170 = vmatpush1.msra.mxu0 0.0
  %1171 = vmatprep.subr.mxu0 0.0
  %1172 = vmatpush1.msra.mxu0 0.0
  %1173 = vmatprep.subr.mxu0 0.0
  %1174 = vmatpush1.msra.mxu0 0.0
  %1175 = vmatprep.subr.mxu0 0.0
  %1176 = vmatpush1.msra.mxu0 0.0
  %1177 = vmatprep.subr.mxu0 0.0
  %1178 = vmatpush1.msra.mxu0 0.0
  %1179 = vmatprep.mubr.f32.mxu0 0.0
  %1180 = vmatmul.mubr.f32.gmra.mrb[0].mxu0 %v1113
  %v1181 = vpop.f32.mrb[0].mxu0
  %v1182 = vadd.f32 %v1110, %v1181
  %v1183 = vpop.f32.mrb[0].mxu0
  %1184 = vdwg.mxu0
  %vm1185 = vcmask 31744
  %v1187 = vsel %vm1185, %v1018, 0
  %vm1189 = vcmask 1043456
  %v1191 = vsel %vm1189, %v1017, 0
  %1193 = vmatprep.subr.mxu0 0.0
  %1194 = vmatpush1.msra.mxu0 %v1191
  %1195 = vmatprep.subr.mxu0 0.0
  %1196 = vmatpush1.msra.mxu0 0.0
  %1197 = vmatprep.subr.mxu0 0.0
  %1198 = vmatpush1.msra.mxu0 0.0
  %1199 = vmatprep.subr.mxu0 0.0
  %1200 = vmatpush1.msra.mxu0 0.0
  %1201 = vmatprep.subr.mxu0 0.0
  %1202 = vmatpush1.msra.mxu0 0.0
  %1203 = vmatprep.subr.mxu0 0.0
  %1204 = vmatpush1.msra.mxu0 0.0
  %1205 = vmatprep.subr.mxu0 0.0
  %1206 = vmatpush1.msra.mxu0 0.0
  %1207 = vmatprep.subr.mxu0 0.0
  %1208 = vmatpush1.msra.mxu0 0.0
  %1209 = vmatprep.subr.mxu0 0.0
  %1210 = vmatpush1.msra.mxu0 0.0
  %1211 = vmatprep.subr.mxu0 0.0
  %1212 = vmatpush1.msra.mxu0 0.0
  %1213 = vmatprep.subr.mxu0 0.0
  %1214 = vmatpush1.msra.mxu0 0.0
  %1215 = vmatprep.subr.mxu0 0.0
  %1216 = vmatpush1.msra.mxu0 0.0
  %1217 = vmatprep.subr.mxu0 0.0
  %1218 = vmatpush1.msra.mxu0 0.0
  %1219 = vmatprep.subr.mxu0 0.0
  %1220 = vmatpush1.msra.mxu0 0.0
  %1221 = vmatprep.subr.mxu0 0.0
  %1222 = vmatpush1.msra.mxu0 0.0
  %1223 = vmatprep.subr.mxu0 0.0
  %1224 = vmatpush1.msra.mxu0 0.0
  %1225 = vmatprep.subr.mxu0 0.0
  %1226 = vmatpush1.msra.mxu0 0.0
  %1227 = vmatprep.subr.mxu0 0.0
  %1228 = vmatpush1.msra.mxu0 0.0
  %1229 = vmatprep.subr.mxu0 0.0
  %1230 = vmatpush1.msra.mxu0 0.0
  %1231 = vmatprep.subr.mxu0 0.0
  %1232 = vmatpush1.msra.mxu0 0.0
  %1233 = vmatprep.subr.mxu0 0.0
  %1234 = vmatpush1.msra.mxu0 0.0
  %1235 = vmatprep.subr.mxu0 0.0
  %1236 = vmatpush1.msra.mxu0 0.0
  %1237 = vmatprep.subr.mxu0 0.0
  %1238 = vmatpush1.msra.mxu0 0.0
  %1239 = vmatprep.subr.mxu0 0.0
  %1240 = vmatpush1.msra.mxu0 0.0
  %1241 = vmatprep.subr.mxu0 0.0
  %1242 = vmatpush1.msra.mxu0 0.0
  %1243 = vmatprep.subr.mxu0 0.0
  %1244 = vmatpush1.msra.mxu0 0.0
  %1245 = vmatprep.subr.mxu0 0.0
  %1246 = vmatpush1.msra.mxu0 0.0
  %1247 = vmatprep.subr.mxu0 0.0
  %1248 = vmatpush1.msra.mxu0 0.0
  %1249 = vmatprep.subr.mxu0 0.0
  %1250 = vmatpush1.msra.mxu0 0.0
  %1251 = vmatprep.subr.mxu0 0.0
  %1252 = vmatpush1.msra.mxu0 0.0
  %1253 = vmatprep.subr.mxu0 0.0
  %1254 = vmatpush1.msra.mxu0 0.0
  %1255 = vmatprep.subr.mxu0 0.0
  %1256 = vmatpush1.msra.mxu0 0.0
  %1257 = vmatprep.mubr.f32.mxu0 0.0
  %1258 = vmatmul.mubr.f32.gmra.mrb[0].mxu0 %v1187
  %v1259 = vpop.f32.mrb[0].mxu0
  %v1260 = vadd.f32 0.0, %v1259
  %v1261 = vpop.f32.mrb[0].mxu0
  %1262 = vdwg.mxu0
  %v1263 = vadd.f32 %v1182, %v1260
  %1264 = vst [vmem:[%s8] sm:$0xff] %v1263
  %v1265 = vrot.slane %v1263, 4
  %v1266 = vadd.f32 %v1263, %v1265
  %v1267 = vrot.slane %v1266, 2
  %v1268 = vadd.f32 %v1266, %v1267
  %v1269 = vrot.slane %v1268, 1
  %v1270 = vadd.f32 %v1268, %v1269
  %1271 = vst [vmem:[%s9] sm:$0x1] %v1270
  %v1272 = vmul.f32 %v1263, %v1263
  %v1273 = vrot.slane %v1272, 4
  %v1274 = vadd.f32 %v1272, %v1273
  %v1275 = vrot.slane %v1274, 2
  %v1276 = vadd.f32 %v1274, %v1275
  %v1277 = vrot.slane %v1276, 1
  %v1278 = vadd.f32 %v1276, %v1277
  %1279 = vst [vmem:[%s9 + $0x1] sm:$0x1] %v1278
  // Predicated region
  $region34: #{pixel_set_encoder.6} parent=0 // pred_check
    _
  $region35: #{pixel_set_encoder.6} parent=0 // pred_check_branch
    %1281 = sbr.rel (0) target = $region37
  $region36: #{pixel_set_encoder.6} parent=0 // pred_region
    _
  $region37: #{pixel_set_encoder.6} parent=0 // pred_fallthru
    _
  // Predicated region
  $region38: #{pixel_set_encoder.6} parent=0 // pred_check
    _
  $region39: #{pixel_set_encoder.6} parent=0 // pred_check_branch
    %1283 = sbr.rel (0) target = $region41
  $region40: #{pixel_set_encoder.6} parent=0 // pred_region
    _
  $region41: #{pixel_set_encoder.6} parent=0 // pred_fallthru
    _
  // Predicated region
  $region42: #{pixel_set_encoder.6} parent=0 // pred_check
    _
  $region43: #{pixel_set_encoder.6} parent=0 // pred_check_branch
    %1285 = sbr.rel (0) target = $region45
  $region44: #{pixel_set_encoder.6} parent=0 // pred_region
    _
  $region45: #{pixel_set_encoder.6} parent=0 // pred_fallthru
    _
  // Predicated region
  $region46: #{pixel_set_encoder.6} parent=0 // pred_check
    _
  $region47: #{pixel_set_encoder.6} parent=0 // pred_check_branch
    %1287 = sbr.rel (0) target = $region49
  $region48: #{pixel_set_encoder.6} parent=0 // pred_region
    _
  $region49: #{pixel_set_encoder.6} parent=0 // pred_fallthru
    _

</llo_original>
